<compile_context>
chip_gen: v5e
topology: v5e:2x2
jax: 0.10.0
libtpu: 0.0.40
codegen_flags: <defaults>
</compile_context>

<pallas_src>
import functools

import jax
import jax.numpy as jnp
from jax.experimental import pallas as pl
from jax.experimental.pallas import tpu as pltpu

EPS = 1e-6

# Minimum number of row-grid steps we aim for: 2 steps per TensorCore on v7x
# (2 TCs share the "parallel" axis), which also guarantees double-buffering on
# single-TC chips (v5e/v6e).
_MIN_ROW_STEPS = 4


# --------------------------------------------------------------------------- #
# Kernel
# --------------------------------------------------------------------------- #
def _residual_kernel(x_ref, w_ref, b_ref, o_ref, *, features, n_tile, approx):
    x = x_ref[...]                                          # (TR, F) f32
    # --- LayerNormalization (unbiased std, matching torch.Tensor.std default) ---
    mean = jnp.mean(x, axis=-1, keepdims=True)              # (TR, 1)
    diff = x - mean
    var = jnp.sum(diff * diff, axis=-1, keepdims=True) * (1.0 / (features - 1))
    std = jnp.sqrt(var)
    inv = pl.reciprocal(std + EPS, approx=approx)           # EUP slot, frees VALU
    normed = (diff * inv).astype(w_ref.dtype)               # bf16 (or f32) MXU operand
    # --- sublayer: Linear(F -> n_tile slice) on the MXU (alpha/beta folded into W, b) ---
    sub = jnp.dot(normed, w_ref[...], preferred_element_type=jnp.float32) + b_ref[...]
    # --- dropout (eval mode = identity) + residual add ---
    if n_tile == features:
        x_res = x                                           # demo path: full-width output
    else:
        off = pl.multiple_of(pl.program_id(1) * n_tile, n_tile)
        x_res = x_ref[:, pl.ds(off, n_tile)]                # matching feature slice of x
    o_ref[...] = x_res + sub


# --------------------------------------------------------------------------- #
# Tiling / VMEM heuristics
# --------------------------------------------------------------------------- #
def _round_up(x, m):
    return ((x + m - 1) // m) * m


def _vmem_caps():
    """(tiling_budget_bytes, vmem_limit_bytes), generation-aware."""
    try:
        cap = int(pltpu.get_tpu_info().vmem_capacity_bytes)
    except Exception:
        cap = 64 * 1024 * 1024                  # conservative fallback: v7x per-TC VMEM
    budget = max(8 * 1024 * 1024, int(cap * 0.4))
    limit = min(int(cap * 0.75), 100 * 1024 * 1024)
    limit = max(limit, budget + 8 * 1024 * 1024)
    return budget, int(limit)


def _pick_n_tile(F, budget, w_itemsize):
    """Output-feature (N) tile for the weight.

    Keep the weight resident (n_tile == F) whenever its single-buffered tile
    fits ~1/3 of the VMEM budget; otherwise tile N (large-F regime) so VMEM
    never blows up and the row tile never collapses.
    """
    if F % 128 != 0:
        return F                                # cannot lane-tile cleanly; keep resident
    if F * F * w_itemsize <= budget // 3:
        return F
    tn = F
    while tn > 128 and (2 * F * tn * w_itemsize > budget // 3 or F % tn != 0):
        tn -= 128
    return tn


def _largest_divisor_tile(R, cap):
    """Largest multiple-of-8 divisor of R that is <= cap, or None."""
    cap = (min(cap, R) // 8) * 8
    for t in range(cap, 7, -8):
        if R % t == 0:
            return t
    return None


def _pick_row_tile(R, F, n_tile, budget, w_itemsize):
    """VMEM-budgeted row tile. Returns (row_tile, needs_host_pad)."""
    w_bufs = 1 if n_tile == F else 2            # single-buffered when grid-invariant
    w_bytes = w_bufs * (F * n_tile * w_itemsize + n_tile * 4)
    # x tile (f32, double-buffered) + out tile (f32, double-buffered)
    # + in-kernel temporaries (~3 f32 row-vectors of width F).
    per_row = 2 * F * 4 + 2 * n_tile * 4 + 3 * F * 4
    cap = 2048                                   # raised from 512: amortize per-step overhead
    avail = budget - w_bytes
    if avail > 0:
        cap = min(cap, max(8, avail // per_row))
    # Core-aware grid length: keep >= _MIN_ROW_STEPS steps when R allows.
    if R >= _MIN_ROW_STEPS * 8:
        cap = min(cap, R // _MIN_ROW_STEPS)
    tile = _largest_divisor_tile(R, cap)
    if tile is not None:
        return tile, False                       # divides R -> no host padding needed
    cap8 = max(8, (min(cap, R) // 8) * 8)
    if R <= cap8 or R < 8:
        return R, False                          # single full-extent block (grid length 1)
    return cap8, True                            # rare fallback: host-side pad


# --------------------------------------------------------------------------- #
# Wrapper
# --------------------------------------------------------------------------- #
def residual_connection(x, alpha, beta, w, b, *, row_tile=None,
                        use_bf16_matmul=True, approx_reciprocal=True):
    """x: (B, S, F) float32; alpha/beta/b: (F,); w: (F, F). Returns (B, S, F) f32."""
    B, S, F = x.shape
    assert F > 1, "unbiased std needs features > 1"
    R = B * S
    x2 = x.reshape(R, F)

    # Fold the LayerNorm affine into the linear layer (pure host-side algebra):
    #   (alpha*z + beta) @ W + b == z @ (diag(alpha) @ W) + (beta @ W + b)
    w_dtype = jnp.bfloat16 if use_bf16_matmul else jnp.float32
    w_folded = (alpha[:, None] * w).astype(w_dtype)                 # (F, F)
    b_folded = (beta @ w + b).astype(jnp.float32).reshape(1, F)     # (1, F)
    w_itemsize = jnp.dtype(w_dtype).itemsize

    budget, vmem_limit = _vmem_caps()
    n_tile = _pick_n_tile(F, budget, w_itemsize)
    if row_tile is None:
        row_tile, needs_pad = _pick_row_tile(R, F, n_tile, budget, w_itemsize)
    else:
        needs_pad = (R % row_tile != 0)

    R_pad = _round_up(R, row_tile) if needs_pad else R
    if R_pad != R:
        # Rare fallback only (costs one extra HBM round-trip of x).
        x2 = jnp.pad(x2, ((0, R_pad - R), (0, 0)))

    row_steps = R_pad // row_tile
    n_steps = F // n_tile
    grid = (row_steps, n_steps)

    w_fetches = 1 if n_steps == 1 else row_steps * n_steps
    cost = pl.CostEstimate(
        flops=2 * R_pad * F * F + 8 * R_pad * F,
        transcendentals=2 * R_pad * n_steps,          # sqrt + reciprocal per row (per N step)
        bytes_accessed=2 * R_pad * F * 4 + w_fetches * F * n_tile * w_itemsize + F * 4,
    )

    kernel = functools.partial(_residual_kernel, features=F, n_tile=n_tile,
                               approx=approx_reciprocal)

    def build(single_buffer_invariants):
        spec_kwargs = {}
        if single_buffer_invariants:
            # Grid-invariant operands: single-buffer to halve their VMEM footprint.
            spec_kwargs = dict(pipeline_mode=pl.Buffered(1))
        in_specs = [
            pl.BlockSpec((row_tile, F), lambda i, n: (i, 0)),                 # x rows (pipelined)
            pl.BlockSpec((F, n_tile), lambda i, n: (0, n), **spec_kwargs),    # folded weight
            pl.BlockSpec((1, n_tile), lambda i, n: (0, n), **spec_kwargs),    # folded bias
        ]
        return pl.pallas_call(
            kernel,
            out_shape=jax.ShapeDtypeStruct((R_pad, F), jnp.float32),
            grid=grid,
            in_specs=in_specs,
            out_specs=pl.BlockSpec((row_tile, n_tile), lambda i, n: (i, n)),
            compiler_params=pltpu.CompilerParams(
                dimension_semantics=("parallel", "arbitrary"),
                vmem_limit_bytes=vmem_limit,
            ),
            cost_estimate=cost,
        )

    want_single_buffer = (n_steps == 1)
    try:
        out = build(want_single_buffer)(x2, w_folded, b_folded)
    except Exception:
        if not want_single_buffer:
            raise
        # Fallback: default double-buffering (functionally identical).
        out = build(False)(x2, w_folded, b_folded)

    if R_pad != R:
        out = out[:R]
    return out.reshape(B, S, F)


# --------------------------------------------------------------------------- #
# Pure-JAX reference (mirrors the PyTorch module)
# --------------------------------------------------------------------------- #
def _reference(x, alpha, beta, w, b):
    mean = jnp.mean(x, axis=-1, keepdims=True)
    # unbiased std, matching torch.Tensor.std default
    var = jnp.sum((x - mean) ** 2, axis=-1, keepdims=True) / (x.shape[-1] - 1)
    std = jnp.sqrt(var)
    normed = alpha * (x - mean) / (std + EPS) + beta
    sub = jnp.einsum("bsf,fg->bsg", normed, w) + b
    return x + sub                                  # dropout = identity (eval mode)


if __name__ == "__main__":
    # Lane-dense feature dim (F multiple of 128); R = B*S = 512 -> row_tile 128, grid (4, 1).
    B, S, F = 4, 128, 128
    key = jax.random.PRNGKey(0)
    kx, kw, kb, ka, kbe = jax.random.split(key, 5)

    x = jax.random.normal(kx, (B, S, F), dtype=jnp.float32)

    # LayerNormalization parameters (non-trivial values exercise the affine folding).
    alpha = 1.0 + 0.1 * jax.random.normal(ka, (F,), dtype=jnp.float32)
    beta = 0.1 * jax.random.normal(kbe, (F,), dtype=jnp.float32)

    # Deterministic sublayer (Linear F -> F) parameters.
    w = 0.1 * jax.random.normal(kw, (F, F), dtype=jnp.float32)
    b = 0.1 * jax.random.normal(kb, (F,), dtype=jnp.float32)

    y = jax.block_until_ready(residual_connection(x, alpha, beta, w, b))

    y_ref = _reference(x, alpha, beta, w, b)
    err = float(jnp.max(jnp.abs(y - y_ref)))
    # Tolerance covers bf16 matmul operands (f32 accumulation) and the approximate
    # EUP reciprocal; pass use_bf16_matmul=False / approx_reciprocal=False for
    # bit-closer parity (the kernel is memory-bound, so the f32 path costs nothing).
    assert jnp.allclose(y, y_ref, atol=5e-2, rtol=5e-2), f"mismatch vs reference (max abs err {err})"

    print("KERNEL_OK")
</pallas_src>

<mosaic_0001>
module attributes {stable_mosaic.version = 11 : i64} {
  func.func @_residual_kernel(%arg0: i32, %arg1: i32, %arg2: memref<128x128xf32, #tpu.memory_space<vmem>>, %arg3: memref<128x128xbf16, #tpu.memory_space<vmem>>, %arg4: memref<1x128xf32, #tpu.memory_space<vmem>>, %arg5: memref<128x128xf32, #tpu.memory_space<vmem>>) attributes {dimension_semantics = [#tpu.dimension_semantics<parallel>, #tpu.dimension_semantics<arbitrary>], iteration_bounds = array<i64: 4, 1>, scalar_prefetch = 0 : i64, scratch_operands = 0 : i64, tpu.core_type = #tpu.core_type<tc>, window_params = [{transform_indices = @transform_0, window_bounds = array<i64: 128, 128>}, {pipeline_mode = #tpu.pipeline_mode<synchronous>, transform_indices = @transform_1, window_bounds = array<i64: 128, 128>}, {pipeline_mode = #tpu.pipeline_mode<synchronous>, transform_indices = @transform_2, window_bounds = array<i64: 1, 128>}, {transform_indices = @transform_3, window_bounds = array<i64: 128, 128>}]} {
    %c0 = arith.constant 0 : index
    %c0_0 = arith.constant 0 : index
    %0 = vector.load %arg2[%c0, %c0_0] : memref<128x128xf32, #tpu.memory_space<vmem>>, vector<128x128xf32>
    %cst = arith.constant dense<0.000000e+00> : vector<128xf32>
    %1 = vector.multi_reduction <add>, %0, %cst [1] : vector<128x128xf32> to vector<128xf32>
    %2 = vector.shape_cast %1 : vector<128xf32> to vector<128x1xf32>
    %cst_1 = arith.constant 1.280000e+02 : f32
    %3 = vector.broadcast %cst_1 : f32 to vector<128x1xf32>
    %4 = arith.divf %2, %3 : vector<128x1xf32>
    %5 = vector.broadcast %4 : vector<128x1xf32> to vector<128x128xf32>
    %6 = arith.subf %0, %5 : vector<128x128xf32>
    %7 = arith.mulf %6, %6 : vector<128x128xf32>
    %cst_2 = arith.constant dense<0.000000e+00> : vector<128xf32>
    %8 = vector.multi_reduction <add>, %7, %cst_2 [1] : vector<128x128xf32> to vector<128xf32>
    %9 = vector.shape_cast %8 : vector<128xf32> to vector<128x1xf32>
    %cst_3 = arith.constant 0.00787401571 : f32
    %10 = vector.broadcast %cst_3 : f32 to vector<128x1xf32>
    %11 = arith.mulf %9, %10 : vector<128x1xf32>
    %12 = math.sqrt %11 : vector<128x1xf32>
    %cst_4 = arith.constant 9.99999997E-7 : f32
    %13 = vector.broadcast %cst_4 : f32 to vector<128x1xf32>
    %14 = arith.addf %12, %13 : vector<128x1xf32>
    %15 = tpu.reciprocal %14 {approx = true} : vector<128x1xf32> -> vector<128x1xf32>
    %16 = vector.broadcast %15 : vector<128x1xf32> to vector<128x128xf32>
    %17 = arith.mulf %6, %16 : vector<128x128xf32>
    %18 = arith.truncf %17 : vector<128x128xf32> to vector<128x128xbf16>
    %c0_5 = arith.constant 0 : index
    %c0_6 = arith.constant 0 : index
    %19 = vector.load %arg3[%c0_5, %c0_6] : memref<128x128xbf16, #tpu.memory_space<vmem>>, vector<128x128xbf16>
    %cst_7 = arith.constant dense<0.000000e+00> : vector<128x128xf32>
    %20 = tpu.matmul %18, %19, %cst_7 {dimension_numbers = #tpu.dot_dimension_numbers<[1], [0], [0], [1], [0, 0, 1, 1], [], []>} : vector<128x128xbf16>, vector<128x128xbf16>, vector<128x128xf32> -> vector<128x128xf32>
    %c0_8 = arith.constant 0 : index
    %c0_9 = arith.constant 0 : index
    %21 = vector.load %arg4[%c0_8, %c0_9] : memref<1x128xf32, #tpu.memory_space<vmem>>, vector<1x128xf32>
    %22 = vector.broadcast %21 : vector<1x128xf32> to vector<128x128xf32>
    %23 = arith.addf %20, %22 : vector<128x128xf32>
    %24 = arith.addf %0, %23 : vector<128x128xf32>
    %c0_10 = arith.constant 0 : index
    %c0_11 = arith.constant 0 : index
    %25 = vector.load %arg5[%c0_10, %c0_11] : memref<128x128xf32, #tpu.memory_space<vmem>>, vector<128x128xf32>
    tpu.vector_store %arg5[%c0_10, %c0_11], %24 {strides = array<i32>} : memref<128x128xf32, #tpu.memory_space<vmem>>, vector<128x128xf32>,
    return
  }
  func.func @transform_0(%arg0: i32, %arg1: i32) -> (i32, i32) {
    %c0_i32 = arith.constant 0 : i32
    %c0_i32_0 = arith.constant 0 : i32
    return %arg0, %c0_i32 : i32, i32
  }
  func.func @transform_1(%arg0: i32, %arg1: i32) -> (i32, i32) {
    %c0_i32 = arith.constant 0 : i32
    %c0_i32_0 = arith.constant 0 : i32
    return %c0_i32, %arg1 : i32, i32
  }
  func.func @transform_2(%arg0: i32, %arg1: i32) -> (i32, i32) {
    %c0_i32 = arith.constant 0 : i32
    %c0_i32_0 = arith.constant 0 : i32
    return %c0_i32, %arg1 : i32, i32
  }
  func.func @transform_3(%arg0: i32, %arg1: i32) -> (i32, i32) {
    %c0_i32 = arith.constant 0 : i32
    return %arg0, %arg1 : i32, i32
  }
}

module attributes {stable_mosaic.version = 11 : i64} {
  func.func @_residual_kernel(%arg0: i32, %arg1: i32, %arg2: memref<128x128xf32, #tpu.memory_space<vmem>>, %arg3: memref<128x128xbf16, #tpu.memory_space<vmem>>, %arg4: memref<1x128xf32, #tpu.memory_space<vmem>>, %arg5: memref<128x128xf32, #tpu.memory_space<vmem>>) attributes {dimension_semantics = [#tpu.dimension_semantics<parallel>, #tpu.dimension_semantics<arbitrary>], iteration_bounds = array<i64: 4, 1>, scalar_prefetch = 0 : i64, scratch_operands = 0 : i64, tpu.core_type = #tpu.core_type<tc>, window_params = [{transform_indices = @transform_0, window_bounds = array<i64: 128, 128>}, {transform_indices = @transform_1, window_bounds = array<i64: 128, 128>}, {transform_indices = @transform_2, window_bounds = array<i64: 1, 128>}, {transform_indices = @transform_3, window_bounds = array<i64: 128, 128>}]} {
    %c0 = arith.constant 0 : index
    %c0_0 = arith.constant 0 : index
    %0 = vector.load %arg2[%c0, %c0_0] : memref<128x128xf32, #tpu.memory_space<vmem>>, vector<128x128xf32>
    %cst = arith.constant dense<0.000000e+00> : vector<128xf32>
    %1 = vector.multi_reduction <add>, %0, %cst [1] : vector<128x128xf32> to vector<128xf32>
    %2 = vector.shape_cast %1 : vector<128xf32> to vector<128x1xf32>
    %cst_1 = arith.constant 1.280000e+02 : f32
    %3 = vector.broadcast %cst_1 : f32 to vector<128x1xf32>
    %4 = arith.divf %2, %3 : vector<128x1xf32>
    %5 = vector.broadcast %4 : vector<128x1xf32> to vector<128x128xf32>
    %6 = arith.subf %0, %5 : vector<128x128xf32>
    %7 = arith.mulf %6, %6 : vector<128x128xf32>
    %cst_2 = arith.constant dense<0.000000e+00> : vector<128xf32>
    %8 = vector.multi_reduction <add>, %7, %cst_2 [1] : vector<128x128xf32> to vector<128xf32>
    %9 = vector.shape_cast %8 : vector<128xf32> to vector<128x1xf32>
    %cst_3 = arith.constant 0.00787401571 : f32
    %10 = vector.broadcast %cst_3 : f32 to vector<128x1xf32>
    %11 = arith.mulf %9, %10 : vector<128x1xf32>
    %12 = math.sqrt %11 : vector<128x1xf32>
    %cst_4 = arith.constant 9.99999997E-7 : f32
    %13 = vector.broadcast %cst_4 : f32 to vector<128x1xf32>
    %14 = arith.addf %12, %13 : vector<128x1xf32>
    %15 = tpu.reciprocal %14 {approx = true} : vector<128x1xf32> -> vector<128x1xf32>
    %16 = vector.broadcast %15 : vector<128x1xf32> to vector<128x128xf32>
    %17 = arith.mulf %6, %16 : vector<128x128xf32>
    %18 = arith.truncf %17 : vector<128x128xf32> to vector<128x128xbf16>
    %c0_5 = arith.constant 0 : index
    %c0_6 = arith.constant 0 : index
    %19 = vector.load %arg3[%c0_5, %c0_6] : memref<128x128xbf16, #tpu.memory_space<vmem>>, vector<128x128xbf16>
    %cst_7 = arith.constant dense<0.000000e+00> : vector<128x128xf32>
    %20 = tpu.matmul %18, %19, %cst_7 {dimension_numbers = #tpu.dot_dimension_numbers<[1], [0], [0], [1], [0, 0, 1, 1], [], []>} : vector<128x128xbf16>, vector<128x128xbf16>, vector<128x128xf32> -> vector<128x128xf32>
    %c0_8 = arith.constant 0 : index
    %c0_9 = arith.constant 0 : index
    %21 = vector.load %arg4[%c0_8, %c0_9] : memref<1x128xf32, #tpu.memory_space<vmem>>, vector<1x128xf32>
    %22 = vector.broadcast %21 : vector<1x128xf32> to vector<128x128xf32>
    %23 = arith.addf %20, %22 : vector<128x128xf32>
    %24 = arith.addf %0, %23 : vector<128x128xf32>
    %c0_10 = arith.constant 0 : index
    %c0_11 = arith.constant 0 : index
    %25 = vector.load %arg5[%c0_10, %c0_11] : memref<128x128xf32, #tpu.memory_space<vmem>>, vector<128x128xf32>
    tpu.vector_store %arg5[%c0_10, %c0_11], %24 {strides = array<i32>} : memref<128x128xf32, #tpu.memory_space<vmem>>, vector<128x128xf32>,
    return
  }
  func.func @transform_0(%arg0: i32, %arg1: i32) -> (i32, i32) {
    %c0_i32 = arith.constant 0 : i32
    %c0_i32_0 = arith.constant 0 : i32
    return %arg0, %c0_i32 : i32, i32
  }
  func.func @transform_1(%arg0: i32, %arg1: i32) -> (i32, i32) {
    %c0_i32 = arith.constant 0 : i32
    %c0_i32_0 = arith.constant 0 : i32
    return %c0_i32, %arg1 : i32, i32
  }
  func.func @transform_2(%arg0: i32, %arg1: i32) -> (i32, i32) {
    %c0_i32 = arith.constant 0 : i32
    %c0_i32_0 = arith.constant 0 : i32
    return %c0_i32, %arg1 : i32, i32
  }
  func.func @transform_3(%arg0: i32, %arg1: i32) -> (i32, i32) {
    %c0_i32 = arith.constant 0 : i32
    return %arg0, %arg1 : i32, i32
  }
}

</mosaic_0001>

<llo_original>
// kernel: tpu_custom_call.1
$region0: #{tpu_custom_call.1}
  #allocation0 [shape = 'u32[]', space=smem, size = 0x4, offset = 0x4, fixed_abs, tag = 'smem constant byte address 0x4 - core index']
  #allocation1 [shape = 'u32[72,128]{1,0:T(1,128)}', space=vmem, size = 0x9000, scoped, tag = 'internal scratch']
  %s0 = inlined_call_operand.hbm [shape: f32[512,128], index: 0, kind: input, shape index: {}]
  %s1 = inlined_call_operand.hbm [shape: bf16[128,128], index: 1, kind: input, shape index: {}]
  %s2 = inlined_call_operand.vmem [shape: f32[1,128], index: 2, kind: input, shape index: {}]
  %s3 = inlined_call_operand.hbm [shape: f32[512,128], index: 3, kind: output, shape index: {}]
  %s4 = sld [smem:[#allocation0]]
  $region53: #{tpu_custom_call.1} parent=0
    _
  %s6 = ssub.s32 1, %s4
  %s7 = scalar_select 0, %s6, %s4
  $region1: #{tpu_custom_call.1} parent=0
    #allocation2 [shape = 'u8[131072]{0}', space=vmem, size = 0x20000, scoped, tag = 'input window, operand 0']
    #allocation3 [shape = 's32[2]{0}', space=sflag, size = 0x8, scoped, tag = 'scoped memory for tpu_custom_call.1']
    #allocation4 [shape = 's32[2]{0}', space=sflag, size = 0x8, scoped, tag = 'scoped memory for tpu_custom_call.1']
    #allocation5 [shape = 'u8[32768]{0}', space=vmem, size = 0x8000, scoped, tag = 'input window, operand 1, single buffered']
    #allocation6 [shape = 's32[1]{0}', space=sflag, size = 0x4, scoped, tag = 'scoped memory for tpu_custom_call.1']
    #allocation7 [shape = 'u8[131072]{0}', space=vmem, size = 0x20000, scoped, tag = 'output window, operand 0']
    %8 = vsyncpa [#allocation3], 0
    %s9 = scalar_lea.sflag [#allocation3], 1
    %10 = vsyncpa %s9, 0
    %11 = vsyncpa [#allocation6], 0
    %12 = vsyncpa [#allocation4], 0
    %s13 = scalar_lea.sflag [#allocation4], 1
    %14 = vsyncpa %s13, 0
    loop: start=0, step=1, limit=6
    $region2: #{tpu_custom_call.1} parent=1 // loop_pre_header
      _
    $region3: #{tpu_custom_call.1} parent=1 // loop_header
      %s16 = sphi 0, %s20
      %p17 = scmp.ge.s32.totalorder %s16, 6
      %s23 = sphi 0, %s35
      %s24 = sphi 0, %s31
      %s25 = sphi 0, %s23
      %s26 = sphi 0, %s24
      %s27 = sphi 0, %s25
      %s28 = sphi 0, %s26
      %s38 = sphi 0, %s40
      %s41 = sphi 0, %s38
      %s42 = sphi 0, %s41
      %s58 = sphi 0, %s42
      %s64 = sphi 0, %s66
      %s67 = sphi 0, %s64
      %s68 = sphi 0, %s67
      %s84 = sphi 0, %s68
      %s90 = sphi 0, %s92
      %s93 = sphi 0, %s90
      %s94 = sphi 0, %s93
      %s110 = sphi 0, %s94
      %s118 = sphi 0, %s120
      %s121 = sphi 0, %s118
      %s122 = sphi 0, %s121
      %s138 = sphi 0, %s122
    $region4: #{tpu_custom_call.1} parent=1 // loop_header_branch
      %19 = sbr.rel (%p17) target = $region8
    $region5: #{tpu_custom_call.1} parent=1 // loop_body
      %s21 = ssub.s32 %s16, 1
      %s22 = ssub.s32 %s16, 2
      %s29 = sadd.s32 1, %s24
      %p30 = scmp.ge.s32.totalorder %s29, 1
      %s31 = scalar_select %p30, 0, %s29
      %s32 = sadd.s32 1, %s23
      %s33 = scalar_select %p30, %s32, %s23
      %p34 = scmp.ge.s32.totalorder %s33, 4
      %s35 = scalar_select %p34, 0, %s33
      %s36 = ssub.s32 %s23, %s35
      %p37 = scmp.eq.s32.totalorder %s36, 0
      %s39 = sadd.s32 %s38, 1
      %s40 = scalar_select %p37, %s38, %s39
      %p43 = pneg %p37
      %p44 = scmp.eq.s32.totalorder %s16, 3
      %p45 = por %p43, %p44
      %p46 = scmp.ne.s32.totalorder %s38, %s41
      %p47 = scmp.eq.s32.totalorder %s16, 0
      %p48 = por %p46, %p47
      %p49 = scmp.ne.s32.totalorder %s38, %s41
      %p50 = scmp.eq.s32.totalorder %s21, 3
      %p51 = por %p49, %p50
      %p52 = scmp.ne.s32.totalorder %s41, %s42
      %p53 = scmp.eq.s32.totalorder %s21, 0
      %p54 = por %p52, %p53
      %p55 = scmp.ne.s32.totalorder %s41, %s42
      %p56 = scmp.eq.s32.totalorder %s22, 3
      %p57 = por %p55, %p56
      %p59 = scmp.ne.s32.totalorder %s42, %s58
      %p60 = scmp.eq.s32.totalorder %s22, 0
      %p61 = por %p59, %p60
      %s62 = ssub.s32 %s24, %s31
      %p63 = scmp.eq.s32.totalorder %s62, 0
      %s65 = sadd.s32 %s64, 1
      %s66 = scalar_select %p63, %s64, %s65
      %p69 = pneg %p63
      %p70 = scmp.eq.s32.totalorder %s16, 3
      %p71 = por %p69, %p70
      %p72 = scmp.ne.s32.totalorder %s64, %s67
      %p73 = scmp.eq.s32.totalorder %s16, 0
      %p74 = por %p72, %p73
      %p75 = scmp.ne.s32.totalorder %s64, %s67
      %p76 = scmp.eq.s32.totalorder %s21, 3
      %p77 = por %p75, %p76
      %p78 = scmp.ne.s32.totalorder %s67, %s68
      %p79 = scmp.eq.s32.totalorder %s21, 0
      %p80 = por %p78, %p79
      %p81 = scmp.ne.s32.totalorder %s67, %s68
      %p82 = scmp.eq.s32.totalorder %s22, 3
      %p83 = por %p81, %p82
      %p85 = scmp.ne.s32.totalorder %s68, %s84
      %p86 = scmp.eq.s32.totalorder %s22, 0
      %p87 = por %p85, %p86
      %s88 = ssub.s32 %s24, %s31
      %p89 = scmp.eq.s32.totalorder %s88, 0
      %s91 = sadd.s32 %s90, 1
      %s92 = scalar_select %p89, %s90, %s91
      %p95 = pneg %p89
      %p96 = scmp.eq.s32.totalorder %s16, 3
      %p97 = por %p95, %p96
      %p98 = scmp.ne.s32.totalorder %s90, %s93
      %p99 = scmp.eq.s32.totalorder %s16, 0
      %p100 = por %p98, %p99
      %p101 = scmp.ne.s32.totalorder %s90, %s93
      %p102 = scmp.eq.s32.totalorder %s21, 3
      %p103 = por %p101, %p102
      %p104 = scmp.ne.s32.totalorder %s93, %s94
      %p105 = scmp.eq.s32.totalorder %s21, 0
      %p106 = por %p104, %p105
      %p107 = scmp.ne.s32.totalorder %s93, %s94
      %p108 = scmp.eq.s32.totalorder %s22, 3
      %p109 = por %p107, %p108
      %p111 = scmp.ne.s32.totalorder %s94, %s110
      %p112 = scmp.eq.s32.totalorder %s22, 0
      %p113 = por %p111, %p112
      %s114 = ssub.s32 %s23, %s35
      %s115 = ssub.s32 %s24, %s31
      %s116 = sor.u32 %s114, %s115
      %p117 = scmp.eq.s32.totalorder %s116, 0
      %s119 = sadd.s32 %s118, 1
      %s120 = scalar_select %p117, %s118, %s119
      %p123 = pneg %p117
      %p124 = scmp.eq.s32.totalorder %s16, 3
      %p125 = por %p123, %p124
      %p126 = scmp.ne.s32.totalorder %s118, %s121
      %p127 = scmp.eq.s32.totalorder %s16, 0
      %p128 = por %p126, %p127
      %p129 = scmp.ne.s32.totalorder %s118, %s121
      %p130 = scmp.eq.s32.totalorder %s21, 3
      %p131 = por %p129, %p130
      %p132 = scmp.ne.s32.totalorder %s121, %s122
      %p133 = scmp.eq.s32.totalorder %s21, 0
      %p134 = por %p132, %p133
      %p135 = scmp.ne.s32.totalorder %s121, %s122
      %p136 = scmp.eq.s32.totalorder %s22, 3
      %p137 = por %p135, %p136
      %p139 = scmp.ne.s32.totalorder %s122, %s138
      %p140 = scmp.eq.s32.totalorder %s22, 0
      %p141 = por %p139, %p140
      %p142 = scmp.le.s32.totalorder 1, %s16
      %p143 = scmp.lt.s32.totalorder %s16, 5
      %p144 = pnand %p142, %p143
      %p145 = pneg %p144
      // Predicated region
      $region9: #{tpu_custom_call.1} parent=5 // pred_check
        _
      $region10: #{tpu_custom_call.1} parent=5 // pred_check_branch
        %147 = sbr.rel (%p144) target = $region12
      $region11: #{tpu_custom_call.1} parent=5 // pred_region
        %s148 = ssub.s32 %s16, 1
        // Predicated region
        $region13: #{tpu_custom_call.1} parent=11 // pred_check
          %p149 = pneg %p80
        $region14: #{tpu_custom_call.1} parent=11 // pred_check_branch
          %151 = sbr.rel (%p149) target = $region16
        $region15: #{tpu_custom_call.1} parent=11 // pred_region
          %153 = vsyncadd [#allocation6], 0
          %s154 = smul.addr %s26, 4
          %s155 = scalar_lea.hbm %s1, %s154
          %s156 = sshll.u32 %s155, 4
          %s157 = int_to_ptr.hbm [resolvable:$true] %s156
          %s158 = sshll.u32 [#allocation5], 4
          %s159 = int_to_ptr.vmem [resolvable:$true] %s158
          %164 = dma.hbm_to_vmem [thread:$0]  %s157, 1024, %s159, [#allocation6], 64, 64, 4
        $region16: #{tpu_custom_call.1} parent=11 // pred_fallthru
          _
        // Predicated region
        $region17: #{tpu_custom_call.1} parent=11 // pred_check
          %p165 = pneg %p106
        $region18: #{tpu_custom_call.1} parent=11 // pred_check_branch
          %167 = sbr.rel (%p165) target = $region20
        $region19: #{tpu_custom_call.1} parent=11 // pred_region
          %p168 = scmp.lt.s32.totalorder %s26, 0
          %s169 = scalar_select %p168, %s26, 0
          %s170 = scalar_lea.vmem %s2, %s169
        $region20: #{tpu_custom_call.1} parent=11 // pred_fallthru
          _
      $region12: #{tpu_custom_call.1} parent=5 // pred_fallthru
        _
      %p171 = scmp.lt.s32.totalorder %s16, 4
      // Predicated region
      $region21: #{tpu_custom_call.1} parent=5 // pred_check
        %p172 = pneg %p171
      $region22: #{tpu_custom_call.1} parent=5 // pred_check_branch
        %174 = sbr.rel (%p172) target = $region24
      $region23: #{tpu_custom_call.1} parent=5 // pred_region
        // Predicated region
        $region25: #{tpu_custom_call.1} parent=23 // pred_check
          %p175 = pneg %p48
        $region26: #{tpu_custom_call.1} parent=23 // pred_check_branch
          %177 = sbr.rel (%p175) target = $region28
        $region27: #{tpu_custom_call.1} parent=23 // pred_region
          %s178 = sand.u32 %s38, 1
          %s179 = scalar_lea.sflag [#allocation3], %s178
          %s180 = sand.u32 %s38, 1
          %s181 = smul.addr %s180, 128
          %s182 = scalar_lea.vmem [#allocation2], %s181
          %s183 = smul.u32 16, %s23
          %185 = vsyncadd %s179, 0
          %s186 = smul.addr %s183, 8
          %s187 = scalar_lea.hbm %s0, %s186
          %s188 = sshll.u32 %s187, 4
          %s189 = int_to_ptr.hbm [resolvable:$true] %s188
          %s190 = sshll.u32 %s182, 4
          %s191 = int_to_ptr.vmem [resolvable:$true] %s190
          %196 = dma.hbm_to_vmem [thread:$0]  %s189, 2048, %s191, %s179, 128, 128, 8
        $region28: #{tpu_custom_call.1} parent=23 // pred_fallthru
          _
      $region24: #{tpu_custom_call.1} parent=5 // pred_fallthru
        _
      %p197 = scmp.le.s32.totalorder 1, %s16
      %p198 = scmp.lt.s32.totalorder %s16, 5
      %p199 = pnand %p197, %p198
      %p200 = pneg %p199
      // Predicated region
      $region29: #{tpu_custom_call.1} parent=5 // pred_check
        _
      $region30: #{tpu_custom_call.1} parent=5 // pred_check_branch
        %202 = sbr.rel (%p199) target = $region32
      $region31: #{tpu_custom_call.1} parent=5 // pred_region
        %s203 = ssub.s32 %s16, 1
        %s204 = sand.u32 %s41, 1
        %s205 = scalar_lea.sflag [#allocation3], %s204
        %s206 = sand.u32 %s41, 1
        %s207 = smul.addr %s206, 128
        %s208 = scalar_lea.vmem [#allocation2], %s207
        // Predicated region
        $region33: #{tpu_custom_call.1} parent=31 // pred_check
          %p209 = pneg %p54
        $region34: #{tpu_custom_call.1} parent=31 // pred_check_branch
          %211 = sbr.rel (%p209) target = $region36
        $region35: #{tpu_custom_call.1} parent=31 // pred_region
          %213 = dma.done %s205, 2048
        $region36: #{tpu_custom_call.1} parent=31 // pred_fallthru
          _
        // Predicated region
        $region37: #{tpu_custom_call.1} parent=31 // pred_check
          %p214 = pneg %p80
        $region38: #{tpu_custom_call.1} parent=31 // pred_check_branch
          %216 = sbr.rel (%p214) target = $region40
        $region39: #{tpu_custom_call.1} parent=31 // pred_region
          %218 = dma.done [#allocation6], 1024
        $region40: #{tpu_custom_call.1} parent=31 // pred_fallthru
          _
        %s219 = sand.u32 %s41, 1
        %s220 = scalar_lea.sflag [#allocation3], %s219
        %s221 = sand.u32 %s41, 1
        %s222 = smul.addr %s221, 128
        %s223 = scalar_lea.vmem [#allocation2], %s222
        %p224 = pneg %p54
        %p225 = pneg %p51
        %p226 = pneg %p80
        %p227 = pneg %p77
        %p228 = scmp.lt.s32.totalorder %s26, 0
        %s229 = scalar_select %p228, %s26, 0
        %s230 = scalar_lea.vmem %s2, %s229
        %p231 = pneg %p106
        %p232 = pneg %p103
        %p233 = pneg %p134
        %p234 = pneg %p131
        %s235 = sand.u32 %s121, 1
        %s236 = scalar_lea.sflag [#allocation4], %s235
        %s237 = sand.u32 %s121, 1
        %s238 = smul.addr %s237, 128
        %s239 = scalar_lea.vmem [#allocation7], %s238
        %s240 = smul.u32 16, %s25
        %p241 = scmp.lt.s32.totalorder %s26, 0
        %s242 = scalar_select %p241, %s26, 0
        %s243 = scalar_lea.vmem %s2, %s242
        %s244 = smul.u32 16, %s25
        %v245 = vld [vmem:[%s208] sm:$0xff]
        %v246 = vld [vmem:[%s208 + $0x8] sm:$0xff]
        %v247 = vld [vmem:[%s208 + $0x10] sm:$0xff]
        %v248 = vld [vmem:[%s208 + $0x18] sm:$0xff]
        %v249 = vld [vmem:[%s208 + $0x20] sm:$0xff]
        %v250 = vld [vmem:[%s208 + $0x28] sm:$0xff]
        %v251 = vld [vmem:[%s208 + $0x30] sm:$0xff]
        %v252 = vld [vmem:[%s208 + $0x38] sm:$0xff]
        %v253 = vld [vmem:[%s208 + $0x40] sm:$0xff]
        %v254 = vld [vmem:[%s208 + $0x48] sm:$0xff]
        %v255 = vld [vmem:[%s208 + $0x50] sm:$0xff]
        %v256 = vld [vmem:[%s208 + $0x58] sm:$0xff]
        %v257 = vld [vmem:[%s208 + $0x60] sm:$0xff]
        %v258 = vld [vmem:[%s208 + $0x68] sm:$0xff]
        %v259 = vld [vmem:[%s208 + $0x70] sm:$0xff]
        %v260 = vld [vmem:[%s208 + $0x78] sm:$0xff]
        %261 = vadd.xlane.f32.xlu0 %v245
        %v262 = vpop.xlane.xlu0 %261
        %263 = vadd.xlane.f32.xlu0 %v246
        %v264 = vpop.xlane.xlu0 %263
        %265 = vadd.xlane.f32.xlu0 %v247
        %v266 = vpop.xlane.xlu0 %265
        %267 = vadd.xlane.f32.xlu0 %v248
        %v268 = vpop.xlane.xlu0 %267
        %269 = vadd.xlane.f32.xlu0 %v249
        %v270 = vpop.xlane.xlu0 %269
        %271 = vadd.xlane.f32.xlu0 %v250
        %v272 = vpop.xlane.xlu0 %271
        %273 = vadd.xlane.f32.xlu0 %v251
        %v274 = vpop.xlane.xlu0 %273
        %275 = vadd.xlane.f32.xlu0 %v252
        %v276 = vpop.xlane.xlu0 %275
        %277 = vadd.xlane.f32.xlu0 %v253
        %v278 = vpop.xlane.xlu0 %277
        %279 = vadd.xlane.f32.xlu0 %v254
        %v280 = vpop.xlane.xlu0 %279
        %281 = vadd.xlane.f32.xlu0 %v255
        %v282 = vpop.xlane.xlu0 %281
        %283 = vadd.xlane.f32.xlu0 %v256
        %v284 = vpop.xlane.xlu0 %283
        %285 = vadd.xlane.f32.xlu0 %v257
        %v286 = vpop.xlane.xlu0 %285
        %287 = vadd.xlane.f32.xlu0 %v258
        %v288 = vpop.xlane.xlu0 %287
        %289 = vadd.xlane.f32.xlu0 %v259
        %v290 = vpop.xlane.xlu0 %289
        %291 = vadd.xlane.f32.xlu0 %v260
        %v292 = vpop.xlane.xlu0 %291
        %v293 = vrcp.pop 128.0
        %v294 = vmul.f32 128.0, %v293
        %v295 = vsub.f32 1.0, %v294
        %v296 = vmul.f32 %v293, %v295
        %v297 = vadd.f32 %v293, %v296
        %vm298 = vweird.f32 %v293
        %v299 = vsel %vm298, %v293, %v297
        %v300 = vmul.f32 %v262, %v299
        %v301 = vmul.f32 %v264, %v299
        %v302 = vmul.f32 %v266, %v299
        %v303 = vmul.f32 %v268, %v299
        %v304 = vmul.f32 %v270, %v299
        %v305 = vmul.f32 %v272, %v299
        %v306 = vmul.f32 %v274, %v299
        %v307 = vmul.f32 %v276, %v299
        %v308 = vmul.f32 %v278, %v299
        %v309 = vmul.f32 %v280, %v299
        %v310 = vmul.f32 %v282, %v299
        %v311 = vmul.f32 %v284, %v299
        %v312 = vmul.f32 %v286, %v299
        %v313 = vmul.f32 %v288, %v299
        %v314 = vmul.f32 %v290, %v299
        %v315 = vmul.f32 %v292, %v299
        %v316 = vsub.f32 %v245, %v300
        %v317 = vsub.f32 %v246, %v301
        %v318 = vsub.f32 %v247, %v302
        %v319 = vsub.f32 %v248, %v303
        %v320 = vsub.f32 %v249, %v304
        %v321 = vsub.f32 %v250, %v305
        %v322 = vsub.f32 %v251, %v306
        %v323 = vsub.f32 %v252, %v307
        %v324 = vsub.f32 %v253, %v308
        %v325 = vsub.f32 %v254, %v309
        %v326 = vsub.f32 %v255, %v310
        %v327 = vsub.f32 %v256, %v311
        %v328 = vsub.f32 %v257, %v312
        %v329 = vsub.f32 %v258, %v313
        %v330 = vsub.f32 %v259, %v314
        %v331 = vsub.f32 %v260, %v315
        %v332 = vmul.f32 %v316, %v316
        %v333 = vmul.f32 %v317, %v317
        %v334 = vmul.f32 %v318, %v318
        %v335 = vmul.f32 %v319, %v319
        %v336 = vmul.f32 %v320, %v320
        %v337 = vmul.f32 %v321, %v321
        %v338 = vmul.f32 %v322, %v322
        %v339 = vmul.f32 %v323, %v323
        %v340 = vmul.f32 %v324, %v324
        %v341 = vmul.f32 %v325, %v325
        %v342 = vmul.f32 %v326, %v326
        %v343 = vmul.f32 %v327, %v327
        %v344 = vmul.f32 %v328, %v328
        %v345 = vmul.f32 %v329, %v329
        %v346 = vmul.f32 %v330, %v330
        %v347 = vmul.f32 %v331, %v331
        %348 = vadd.xlane.f32.xlu0 %v332
        %v349 = vpop.xlane.xlu0 %348
        %350 = vadd.xlane.f32.xlu0 %v333
        %v351 = vpop.xlane.xlu0 %350
        %352 = vadd.xlane.f32.xlu0 %v334
        %v353 = vpop.xlane.xlu0 %352
        %354 = vadd.xlane.f32.xlu0 %v335
        %v355 = vpop.xlane.xlu0 %354
        %356 = vadd.xlane.f32.xlu0 %v336
        %v357 = vpop.xlane.xlu0 %356
        %358 = vadd.xlane.f32.xlu0 %v337
        %v359 = vpop.xlane.xlu0 %358
        %360 = vadd.xlane.f32.xlu0 %v338
        %v361 = vpop.xlane.xlu0 %360
        %362 = vadd.xlane.f32.xlu0 %v339
        %v363 = vpop.xlane.xlu0 %362
        %364 = vadd.xlane.f32.xlu0 %v340
        %v365 = vpop.xlane.xlu0 %364
        %366 = vadd.xlane.f32.xlu0 %v341
        %v367 = vpop.xlane.xlu0 %366
        %368 = vadd.xlane.f32.xlu0 %v342
        %v369 = vpop.xlane.xlu0 %368
        %370 = vadd.xlane.f32.xlu0 %v343
        %v371 = vpop.xlane.xlu0 %370
        %372 = vadd.xlane.f32.xlu0 %v344
        %v373 = vpop.xlane.xlu0 %372
        %374 = vadd.xlane.f32.xlu0 %v345
        %v375 = vpop.xlane.xlu0 %374
        %376 = vadd.xlane.f32.xlu0 %v346
        %v377 = vpop.xlane.xlu0 %376
        %378 = vadd.xlane.f32.xlu0 %v347
        %v379 = vpop.xlane.xlu0 %378
        %v380 = vmul.f32 %v349, 0.007874016
        %v381 = vmul.f32 %v351, 0.007874016
        %v382 = vmul.f32 %v353, 0.007874016
        %v383 = vmul.f32 %v355, 0.007874016
        %v384 = vmul.f32 %v357, 0.007874016
        %v385 = vmul.f32 %v359, 0.007874016
        %v386 = vmul.f32 %v361, 0.007874016
        %v387 = vmul.f32 %v363, 0.007874016
        %v388 = vmul.f32 %v365, 0.007874016
        %v389 = vmul.f32 %v367, 0.007874016
        %v390 = vmul.f32 %v369, 0.007874016
        %v391 = vmul.f32 %v371, 0.007874016
        %v392 = vmul.f32 %v373, 0.007874016
        %v393 = vmul.f32 %v375, 0.007874016
        %v394 = vmul.f32 %v377, 0.007874016
        %v395 = vmul.f32 %v379, 0.007874016
        %v396 = vrsqrt.pop %v380
        %v397 = vmul.f32 %v396, %v380
        %v398 = vmul.f32 %v397, %v396
        %v399 = vmul.f32 0.5, %v398
        %v400 = vsub.f32 1.5, %v399
        %v401 = vmul.f32 %v396, %v400
        %v402 = vmul.f32 %v380, %v401
        %vm403 = vcmp.eq.f32.partialorder %v380, inf
        %v404 = vsel %vm403, %v380, %v402
        %vm405 = vcmp.eq.f32.partialorder %v380, 0.0
        %v406 = vand.u32 %v380, 2147483648
        %v407 = vsel %vm405, %v406, %v404
        %v408 = vrsqrt.pop %v381
        %v409 = vmul.f32 %v408, %v381
        %v410 = vmul.f32 %v409, %v408
        %v411 = vmul.f32 0.5, %v410
        %v412 = vsub.f32 1.5, %v411
        %v413 = vmul.f32 %v408, %v412
        %v414 = vmul.f32 %v381, %v413
        %vm415 = vcmp.eq.f32.partialorder %v381, inf
        %v416 = vsel %vm415, %v381, %v414
        %vm417 = vcmp.eq.f32.partialorder %v381, 0.0
        %v418 = vand.u32 %v381, 2147483648
        %v419 = vsel %vm417, %v418, %v416
        %v420 = vrsqrt.pop %v382
        %v421 = vmul.f32 %v420, %v382
        %v422 = vmul.f32 %v421, %v420
        %v423 = vmul.f32 0.5, %v422
        %v424 = vsub.f32 1.5, %v423
        %v425 = vmul.f32 %v420, %v424
        %v426 = vmul.f32 %v382, %v425
        %vm427 = vcmp.eq.f32.partialorder %v382, inf
        %v428 = vsel %vm427, %v382, %v426
        %vm429 = vcmp.eq.f32.partialorder %v382, 0.0
        %v430 = vand.u32 %v382, 2147483648
        %v431 = vsel %vm429, %v430, %v428
        %v432 = vrsqrt.pop %v383
        %v433 = vmul.f32 %v432, %v383
        %v434 = vmul.f32 %v433, %v432
        %v435 = vmul.f32 0.5, %v434
        %v436 = vsub.f32 1.5, %v435
        %v437 = vmul.f32 %v432, %v436
        %v438 = vmul.f32 %v383, %v437
        %vm439 = vcmp.eq.f32.partialorder %v383, inf
        %v440 = vsel %vm439, %v383, %v438
        %vm441 = vcmp.eq.f32.partialorder %v383, 0.0
        %v442 = vand.u32 %v383, 2147483648
        %v443 = vsel %vm441, %v442, %v440
        %v444 = vrsqrt.pop %v384
        %v445 = vmul.f32 %v444, %v384
        %v446 = vmul.f32 %v445, %v444
        %v447 = vmul.f32 0.5, %v446
        %v448 = vsub.f32 1.5, %v447
        %v449 = vmul.f32 %v444, %v448
        %v450 = vmul.f32 %v384, %v449
        %vm451 = vcmp.eq.f32.partialorder %v384, inf
        %v452 = vsel %vm451, %v384, %v450
        %vm453 = vcmp.eq.f32.partialorder %v384, 0.0
        %v454 = vand.u32 %v384, 2147483648
        %v455 = vsel %vm453, %v454, %v452
        %v456 = vrsqrt.pop %v385
        %v457 = vmul.f32 %v456, %v385
        %v458 = vmul.f32 %v457, %v456
        %v459 = vmul.f32 0.5, %v458
        %v460 = vsub.f32 1.5, %v459
        %v461 = vmul.f32 %v456, %v460
        %v462 = vmul.f32 %v385, %v461
        %vm463 = vcmp.eq.f32.partialorder %v385, inf
        %v464 = vsel %vm463, %v385, %v462
        %vm465 = vcmp.eq.f32.partialorder %v385, 0.0
        %v466 = vand.u32 %v385, 2147483648
        %v467 = vsel %vm465, %v466, %v464
        %v468 = vrsqrt.pop %v386
        %v469 = vmul.f32 %v468, %v386
        %v470 = vmul.f32 %v469, %v468
        %v471 = vmul.f32 0.5, %v470
        %v472 = vsub.f32 1.5, %v471
        %v473 = vmul.f32 %v468, %v472
        %v474 = vmul.f32 %v386, %v473
        %vm475 = vcmp.eq.f32.partialorder %v386, inf
        %v476 = vsel %vm475, %v386, %v474
        %vm477 = vcmp.eq.f32.partialorder %v386, 0.0
        %v478 = vand.u32 %v386, 2147483648
        %v479 = vsel %vm477, %v478, %v476
        %v480 = vrsqrt.pop %v387
        %v481 = vmul.f32 %v480, %v387
        %v482 = vmul.f32 %v481, %v480
        %v483 = vmul.f32 0.5, %v482
        %v484 = vsub.f32 1.5, %v483
        %v485 = vmul.f32 %v480, %v484
        %v486 = vmul.f32 %v387, %v485
        %vm487 = vcmp.eq.f32.partialorder %v387, inf
        %v488 = vsel %vm487, %v387, %v486
        %vm489 = vcmp.eq.f32.partialorder %v387, 0.0
        %v490 = vand.u32 %v387, 2147483648
        %v491 = vsel %vm489, %v490, %v488
        %v492 = vrsqrt.pop %v388
        %v493 = vmul.f32 %v492, %v388
        %v494 = vmul.f32 %v493, %v492
        %v495 = vmul.f32 0.5, %v494
        %v496 = vsub.f32 1.5, %v495
        %v497 = vmul.f32 %v492, %v496
        %v498 = vmul.f32 %v388, %v497
        %vm499 = vcmp.eq.f32.partialorder %v388, inf
        %v500 = vsel %vm499, %v388, %v498
        %vm501 = vcmp.eq.f32.partialorder %v388, 0.0
        %v502 = vand.u32 %v388, 2147483648
        %v503 = vsel %vm501, %v502, %v500
        %v504 = vrsqrt.pop %v389
        %v505 = vmul.f32 %v504, %v389
        %v506 = vmul.f32 %v505, %v504
        %v507 = vmul.f32 0.5, %v506
        %v508 = vsub.f32 1.5, %v507
        %v509 = vmul.f32 %v504, %v508
        %v510 = vmul.f32 %v389, %v509
        %vm511 = vcmp.eq.f32.partialorder %v389, inf
        %v512 = vsel %vm511, %v389, %v510
        %vm513 = vcmp.eq.f32.partialorder %v389, 0.0
        %v514 = vand.u32 %v389, 2147483648
        %v515 = vsel %vm513, %v514, %v512
        %v516 = vrsqrt.pop %v390
        %v517 = vmul.f32 %v516, %v390
        %v518 = vmul.f32 %v517, %v516
        %v519 = vmul.f32 0.5, %v518
        %v520 = vsub.f32 1.5, %v519
        %v521 = vmul.f32 %v516, %v520
        %v522 = vmul.f32 %v390, %v521
        %vm523 = vcmp.eq.f32.partialorder %v390, inf
        %v524 = vsel %vm523, %v390, %v522
        %vm525 = vcmp.eq.f32.partialorder %v390, 0.0
        %v526 = vand.u32 %v390, 2147483648
        %v527 = vsel %vm525, %v526, %v524
        %v528 = vrsqrt.pop %v391
        %v529 = vmul.f32 %v528, %v391
        %v530 = vmul.f32 %v529, %v528
        %v531 = vmul.f32 0.5, %v530
        %v532 = vsub.f32 1.5, %v531
        %v533 = vmul.f32 %v528, %v532
        %v534 = vmul.f32 %v391, %v533
        %vm535 = vcmp.eq.f32.partialorder %v391, inf
        %v536 = vsel %vm535, %v391, %v534
        %vm537 = vcmp.eq.f32.partialorder %v391, 0.0
        %v538 = vand.u32 %v391, 2147483648
        %v539 = vsel %vm537, %v538, %v536
        %v540 = vrsqrt.pop %v392
        %v541 = vmul.f32 %v540, %v392
        %v542 = vmul.f32 %v541, %v540
        %v543 = vmul.f32 0.5, %v542
        %v544 = vsub.f32 1.5, %v543
        %v545 = vmul.f32 %v540, %v544
        %v546 = vmul.f32 %v392, %v545
        %vm547 = vcmp.eq.f32.partialorder %v392, inf
        %v548 = vsel %vm547, %v392, %v546
        %vm549 = vcmp.eq.f32.partialorder %v392, 0.0
        %v550 = vand.u32 %v392, 2147483648
        %v551 = vsel %vm549, %v550, %v548
        %v552 = vrsqrt.pop %v393
        %v553 = vmul.f32 %v552, %v393
        %v554 = vmul.f32 %v553, %v552
        %v555 = vmul.f32 0.5, %v554
        %v556 = vsub.f32 1.5, %v555
        %v557 = vmul.f32 %v552, %v556
        %v558 = vmul.f32 %v393, %v557
        %vm559 = vcmp.eq.f32.partialorder %v393, inf
        %v560 = vsel %vm559, %v393, %v558
        %vm561 = vcmp.eq.f32.partialorder %v393, 0.0
        %v562 = vand.u32 %v393, 2147483648
        %v563 = vsel %vm561, %v562, %v560
        %v564 = vrsqrt.pop %v394
        %v565 = vmul.f32 %v564, %v394
        %v566 = vmul.f32 %v565, %v564
        %v567 = vmul.f32 0.5, %v566
        %v568 = vsub.f32 1.5, %v567
        %v569 = vmul.f32 %v564, %v568
        %v570 = vmul.f32 %v394, %v569
        %vm571 = vcmp.eq.f32.partialorder %v394, inf
        %v572 = vsel %vm571, %v394, %v570
        %vm573 = vcmp.eq.f32.partialorder %v394, 0.0
        %v574 = vand.u32 %v394, 2147483648
        %v575 = vsel %vm573, %v574, %v572
        %v576 = vrsqrt.pop %v395
        %v577 = vmul.f32 %v576, %v395
        %v578 = vmul.f32 %v577, %v576
        %v579 = vmul.f32 0.5, %v578
        %v580 = vsub.f32 1.5, %v579
        %v581 = vmul.f32 %v576, %v580
        %v582 = vmul.f32 %v395, %v581
        %vm583 = vcmp.eq.f32.partialorder %v395, inf
        %v584 = vsel %vm583, %v395, %v582
        %vm585 = vcmp.eq.f32.partialorder %v395, 0.0
        %v586 = vand.u32 %v395, 2147483648
        %v587 = vsel %vm585, %v586, %v584
        %v588 = vadd.f32 %v407, 1e-06
        %v589 = vadd.f32 %v419, 1e-06
        %v590 = vadd.f32 %v431, 1e-06
        %v591 = vadd.f32 %v443, 1e-06
        %v592 = vadd.f32 %v455, 1e-06
        %v593 = vadd.f32 %v467, 1e-06
        %v594 = vadd.f32 %v479, 1e-06
        %v595 = vadd.f32 %v491, 1e-06
        %v596 = vadd.f32 %v503, 1e-06
        %v597 = vadd.f32 %v515, 1e-06
        %v598 = vadd.f32 %v527, 1e-06
        %v599 = vadd.f32 %v539, 1e-06
        %v600 = vadd.f32 %v551, 1e-06
        %v601 = vadd.f32 %v563, 1e-06
        %v602 = vadd.f32 %v575, 1e-06
        %v603 = vadd.f32 %v587, 1e-06
        %v604 = vrcp.pop %v588
        %v605 = vrcp.pop %v589
        %v606 = vrcp.pop %v590
        %v607 = vrcp.pop %v591
        %v608 = vrcp.pop %v592
        %v609 = vrcp.pop %v593
        %v610 = vrcp.pop %v594
        %v611 = vrcp.pop %v595
        %v612 = vrcp.pop %v596
        %v613 = vrcp.pop %v597
        %v614 = vrcp.pop %v598
        %v615 = vrcp.pop %v599
        %v616 = vrcp.pop %v600
        %v617 = vrcp.pop %v601
        %v618 = vrcp.pop %v602
        %v619 = vrcp.pop %v603
        %v620 = vmul.f32 %v316, %v604
        %v621 = vmul.f32 %v317, %v605
        %v622 = vmul.f32 %v318, %v606
        %v623 = vmul.f32 %v319, %v607
        %v624 = vmul.f32 %v320, %v608
        %v625 = vmul.f32 %v321, %v609
        %v626 = vmul.f32 %v322, %v610
        %v627 = vmul.f32 %v323, %v611
        %v628 = vmul.f32 %v324, %v612
        %v629 = vmul.f32 %v325, %v613
        %v630 = vmul.f32 %v326, %v614
        %v631 = vmul.f32 %v327, %v615
        %v632 = vmul.f32 %v328, %v616
        %v633 = vmul.f32 %v329, %v617
        %v634 = vmul.f32 %v330, %v618
        %v635 = vmul.f32 %v331, %v619
        %v636 = vpack.c.bf16 %v621, %v620
        %v637 = vpack.c.bf16 %v623, %v622
        %v638 = vpack.c.bf16 %v625, %v624
        %v639 = vpack.c.bf16 %v627, %v626
        %v640 = vpack.c.bf16 %v629, %v628
        %v641 = vpack.c.bf16 %v631, %v630
        %v642 = vpack.c.bf16 %v633, %v632
        %v643 = vpack.c.bf16 %v635, %v634
        %v644 = vld [vmem:[#allocation5] sm:$0xf]
        %v645 = vld [vmem:[#allocation5 + $0x4] sm:$0xf]
        %v646 = vld [vmem:[#allocation5 + $0x8] sm:$0xf]
        %v647 = vld [vmem:[#allocation5 + $0xc] sm:$0xf]
        %v648 = vld [vmem:[#allocation5 + $0x10] sm:$0xf]
        %v649 = vld [vmem:[#allocation5 + $0x14] sm:$0xf]
        %v650 = vld [vmem:[#allocation5 + $0x18] sm:$0xf]
        %v651 = vld [vmem:[#allocation5 + $0x1c] sm:$0xf]
        %v652 = vld [vmem:[#allocation5 + $0x20] sm:$0xf]
        %v653 = vld [vmem:[#allocation5 + $0x24] sm:$0xf]
        %v654 = vld [vmem:[#allocation5 + $0x28] sm:$0xf]
        %v655 = vld [vmem:[#allocation5 + $0x2c] sm:$0xf]
        %v656 = vld [vmem:[#allocation5 + $0x30] sm:$0xf]
        %v657 = vld [vmem:[#allocation5 + $0x34] sm:$0xf]
        %v658 = vld [vmem:[#allocation5 + $0x38] sm:$0xf]
        %v659 = vld [vmem:[#allocation5 + $0x3c] sm:$0xf]
        %v660 = vld [vmem:[%s243] sm:$0x1]
        %v662 = vperm.slane %v660, 0
        %v680 = vunpack.c.l.b16 %v644
        %v681 = vunpack.c.l.b16 %v645
        %v682 = vunpack.c.l.b16 %v646
        %v683 = vunpack.c.l.b16 %v647
        %v684 = vunpack.c.l.b16 %v648
        %v685 = vunpack.c.l.b16 %v649
        %v686 = vunpack.c.l.b16 %v650
        %v687 = vunpack.c.l.b16 %v651
        %v688 = vunpack.c.l.b16 %v652
        %v689 = vunpack.c.l.b16 %v653
        %v690 = vunpack.c.l.b16 %v654
        %v691 = vunpack.c.l.b16 %v655
        %v692 = vunpack.c.l.b16 %v656
        %v693 = vunpack.c.l.b16 %v657
        %v694 = vunpack.c.l.b16 %v658
        %v695 = vunpack.c.l.b16 %v659
        %v696 = vpack.c.b16 %v681, %v680
        %v697 = vpack.c.b16 %v683, %v682
        %v698 = vpack.c.b16 %v685, %v684
        %v699 = vpack.c.b16 %v687, %v686
        %v700 = vpack.c.b16 %v689, %v688
        %v701 = vpack.c.b16 %v691, %v690
        %v702 = vpack.c.b16 %v693, %v692
        %v703 = vpack.c.b16 %v695, %v694
        %712 = vmatpush.bf16.msra.mxu0 %v703
        %713 = vmatpush.bf16.msra.mxu0 %v702
        %714 = vmatpush.bf16.msra.mxu0 %v701
        %715 = vmatpush.bf16.msra.mxu0 %v700
        %716 = vmatpush.bf16.msra.mxu0 %v699
        %717 = vmatpush.bf16.msra.mxu0 %v698
        %718 = vmatpush.bf16.msra.mxu0 %v697
        %719 = vmatpush.bf16.msra.mxu0 %v696
        %720 = vmatmul.bf16.gmra.mxu0 %v636
        %v721 = vpop.f32.mrf.mxu0
        %v722 = vadd.f32 %v662, %v721
        %v723 = vpop.f32.mrf.mxu0
        %v724 = vadd.f32 %v662, %v723
        %725 = vmatmul.bf16.gmra.mxu0 %v637
        %v726 = vpop.f32.mrf.mxu0
        %v727 = vadd.f32 %v662, %v726
        %v728 = vpop.f32.mrf.mxu0
        %v729 = vadd.f32 %v662, %v728
        %730 = vmatmul.bf16.gmra.mxu0 %v638
        %v731 = vpop.f32.mrf.mxu0
        %v732 = vadd.f32 %v662, %v731
        %v733 = vpop.f32.mrf.mxu0
        %v734 = vadd.f32 %v662, %v733
        %735 = vmatmul.bf16.gmra.mxu0 %v639
        %v736 = vpop.f32.mrf.mxu0
        %v737 = vadd.f32 %v662, %v736
        %v738 = vpop.f32.mrf.mxu0
        %v739 = vadd.f32 %v662, %v738
        %740 = vmatmul.bf16.gmra.mxu0 %v640
        %v741 = vpop.f32.mrf.mxu0
        %v742 = vadd.f32 %v662, %v741
        %v743 = vpop.f32.mrf.mxu0
        %v744 = vadd.f32 %v662, %v743
        %745 = vmatmul.bf16.gmra.mxu0 %v641
        %v746 = vpop.f32.mrf.mxu0
        %v747 = vadd.f32 %v662, %v746
        %v748 = vpop.f32.mrf.mxu0
        %v749 = vadd.f32 %v662, %v748
        %750 = vmatmul.bf16.gmra.mxu0 %v642
        %v751 = vpop.f32.mrf.mxu0
        %v752 = vadd.f32 %v662, %v751
        %v753 = vpop.f32.mrf.mxu0
        %v754 = vadd.f32 %v662, %v753
        %755 = vmatmul.bf16.gmra.mxu0 %v643
        %v756 = vpop.f32.mrf.mxu0
        %v757 = vadd.f32 %v662, %v756
        %v758 = vpop.f32.mrf.mxu0
        %v759 = vadd.f32 %v662, %v758
        %760 = vdwg.mxu0
        %v761 = vadd.f32 %v245, %v722
        %v762 = vadd.f32 %v246, %v724
        %v763 = vadd.f32 %v247, %v727
        %v764 = vadd.f32 %v248, %v729
        %v765 = vadd.f32 %v249, %v732
        %v766 = vadd.f32 %v250, %v734
        %v767 = vadd.f32 %v251, %v737
        %v768 = vadd.f32 %v252, %v739
        %v769 = vadd.f32 %v253, %v742
        %v770 = vadd.f32 %v254, %v744
        %v771 = vadd.f32 %v255, %v747
        %v772 = vadd.f32 %v256, %v749
        %v773 = vadd.f32 %v257, %v752
        %v774 = vadd.f32 %v258, %v754
        %v775 = vadd.f32 %v259, %v757
        %v776 = vadd.f32 %v260, %v759
        %777 = vst [vmem:[%s239] sm:$0xff] %v761
        %778 = vst [vmem:[%s239 + $0x8] sm:$0xff] %v762
        %779 = vst [vmem:[%s239 + $0x10] sm:$0xff] %v763
        %780 = vst [vmem:[%s239 + $0x18] sm:$0xff] %v764
        %781 = vst [vmem:[%s239 + $0x20] sm:$0xff] %v765
        %782 = vst [vmem:[%s239 + $0x28] sm:$0xff] %v766
        %783 = vst [vmem:[%s239 + $0x30] sm:$0xff] %v767
        %784 = vst [vmem:[%s239 + $0x38] sm:$0xff] %v768
        %785 = vst [vmem:[%s239 + $0x40] sm:$0xff] %v769
        %786 = vst [vmem:[%s239 + $0x48] sm:$0xff] %v770
        %787 = vst [vmem:[%s239 + $0x50] sm:$0xff] %v771
        %788 = vst [vmem:[%s239 + $0x58] sm:$0xff] %v772
        %789 = vst [vmem:[%s239 + $0x60] sm:$0xff] %v773
        %790 = vst [vmem:[%s239 + $0x68] sm:$0xff] %v774
        %791 = vst [vmem:[%s239 + $0x70] sm:$0xff] %v775
        %792 = vst [vmem:[%s239 + $0x78] sm:$0xff] %v776
        %s793 = sand.u32 %s121, 1
        %s794 = scalar_lea.sflag [#allocation4], %s793
        %s795 = sand.u32 %s121, 1
        %s796 = smul.addr %s795, 128
        %s797 = scalar_lea.vmem [#allocation7], %s796
        // Predicated region
        $region41: #{tpu_custom_call.1} parent=31 // pred_check
          %p798 = pneg %p131
        $region42: #{tpu_custom_call.1} parent=31 // pred_check_branch
          %800 = sbr.rel (%p798) target = $region44
        $region43: #{tpu_custom_call.1} parent=31 // pred_region
          %s801 = smul.u32 16, %s25
          %803 = vsyncadd %s794, 0
          %s804 = sadd.s32 %s26, %s801
          %s805 = smul.addr %s804, 8
          %s806 = scalar_lea.hbm %s3, %s805
          %s807 = sshll.u32 %s797, 4
          %s808 = int_to_ptr.vmem [resolvable:$true] %s807
          %s809 = sshll.u32 %s806, 4
          %s810 = int_to_ptr.hbm [resolvable:$true] %s809
          %815 = dma.vmem_to_hbm [thread:$0]  %s808, 2048, %s810, %s794, 128, 128, 8
        $region44: #{tpu_custom_call.1} parent=31 // pred_fallthru
          _
      $region32: #{tpu_custom_call.1} parent=5 // pred_fallthru
        _
      %p816 = scmp.le.s32.totalorder 2, %s16
      // Predicated region
      $region45: #{tpu_custom_call.1} parent=5 // pred_check
        %p817 = pneg %p816
      $region46: #{tpu_custom_call.1} parent=5 // pred_check_branch
        %819 = sbr.rel (%p817) target = $region48
      $region47: #{tpu_custom_call.1} parent=5 // pred_region
        %s820 = ssub.s32 %s16, 2
        // Predicated region
        $region49: #{tpu_custom_call.1} parent=47 // pred_check
          %p821 = pneg %p137
        $region50: #{tpu_custom_call.1} parent=47 // pred_check_branch
          %823 = sbr.rel (%p821) target = $region52
        $region51: #{tpu_custom_call.1} parent=47 // pred_region
          %s824 = sand.u32 %s122, 1
          %s825 = scalar_lea.sflag [#allocation4], %s824
          %s826 = sand.u32 %s122, 1
          %s827 = smul.addr %s826, 128
          %s828 = scalar_lea.vmem [#allocation7], %s827
          %830 = dma.done %s825, 2048
        $region52: #{tpu_custom_call.1} parent=47 // pred_fallthru
          _
      $region48: #{tpu_custom_call.1} parent=5 // pred_fallthru
        _
    $region6: #{tpu_custom_call.1} parent=1 // loop_footer
      %s20 = sadd.s32 1, %s16
    $region7: #{tpu_custom_call.1} parent=1 // loop_footer_branch
      %15 = sbr.rel target = $region3
    $region8: #{tpu_custom_call.1} parent=1 // loop_exit
      _
    %831 = vsyncpa [#allocation3], 1
    %s832 = scalar_lea.sflag [#allocation3], 1
    %833 = vsyncpa %s832, 1
    %834 = vsyncpa [#allocation6], 1
    %835 = vsyncpa [#allocation4], 1
    %s836 = scalar_lea.sflag [#allocation4], 1
    %837 = vsyncpa %s836, 1

// kernel: tpu_custom_call.1
$region0: #{tpu_custom_call.1}
  #allocation0 [shape = 'u32[]', space=smem, size = 0x4, offset = 0x4, fixed_abs, tag = 'smem constant byte address 0x4 - core index']
  #allocation1 [shape = 'u32[72,128]{1,0:T(1,128)}', space=vmem, size = 0x9000, scoped, tag = 'internal scratch']
  %s0 = inlined_call_operand.hbm [shape: f32[512,128], index: 0, kind: input, shape index: {}]
  %s1 = inlined_call_operand.hbm [shape: bf16[128,128], index: 1, kind: input, shape index: {}]
  %s2 = inlined_call_operand.vmem [shape: f32[1,128], index: 2, kind: input, shape index: {}]
  %s3 = inlined_call_operand.hbm [shape: f32[512,128], index: 3, kind: output, shape index: {}]
  %s4 = sld [smem:[#allocation0]]
  $region53: #{tpu_custom_call.1} parent=0
    _
  %s6 = ssub.s32 1, %s4
  %s7 = scalar_select 0, %s6, %s4
  $region1: #{tpu_custom_call.1} parent=0
    #allocation2 [shape = 'u8[131072]{0}', space=vmem, size = 0x20000, scoped, tag = 'input window, operand 0']
    #allocation3 [shape = 's32[2]{0}', space=sflag, size = 0x8, scoped, tag = 'scoped memory for tpu_custom_call.1']
    #allocation4 [shape = 's32[2]{0}', space=sflag, size = 0x8, scoped, tag = 'scoped memory for tpu_custom_call.1']
    #allocation5 [shape = 'u8[32768]{0}', space=vmem, size = 0x8000, scoped, tag = 'input window, operand 1, single buffered']
    #allocation6 [shape = 's32[1]{0}', space=sflag, size = 0x4, scoped, tag = 'scoped memory for tpu_custom_call.1']
    #allocation7 [shape = 'u8[131072]{0}', space=vmem, size = 0x20000, scoped, tag = 'output window, operand 0']
    %8 = vsyncpa [#allocation3], 0
    %s9 = scalar_lea.sflag [#allocation3], 1
    %10 = vsyncpa %s9, 0
    %11 = vsyncpa [#allocation6], 0
    %12 = vsyncpa [#allocation4], 0
    %s13 = scalar_lea.sflag [#allocation4], 1
    %14 = vsyncpa %s13, 0
    loop: start=0, step=1, limit=6
    $region2: #{tpu_custom_call.1} parent=1 // loop_pre_header
      _
    $region3: #{tpu_custom_call.1} parent=1 // loop_header
      %s16 = sphi 0, %s20
      %p17 = scmp.ge.s32.totalorder %s16, 6
      %s23 = sphi 0, %s35
      %s24 = sphi 0, %s31
      %s25 = sphi 0, %s23
      %s26 = sphi 0, %s24
      %s27 = sphi 0, %s25
      %s28 = sphi 0, %s26
      %s38 = sphi 0, %s40
      %s41 = sphi 0, %s38
      %s42 = sphi 0, %s41
      %s58 = sphi 0, %s42
      %s64 = sphi 0, %s66
      %s67 = sphi 0, %s64
      %s68 = sphi 0, %s67
      %s84 = sphi 0, %s68
      %s90 = sphi 0, %s92
      %s93 = sphi 0, %s90
      %s94 = sphi 0, %s93
      %s110 = sphi 0, %s94
      %s118 = sphi 0, %s120
      %s121 = sphi 0, %s118
      %s122 = sphi 0, %s121
      %s138 = sphi 0, %s122
    $region4: #{tpu_custom_call.1} parent=1 // loop_header_branch
      %19 = sbr.rel (%p17) target = $region8
    $region5: #{tpu_custom_call.1} parent=1 // loop_body
      %s21 = ssub.s32 %s16, 1
      %s22 = ssub.s32 %s16, 2
      %s29 = sadd.s32 1, %s24
      %p30 = scmp.ge.s32.totalorder %s29, 1
      %s31 = scalar_select %p30, 0, %s29
      %s32 = sadd.s32 1, %s23
      %s33 = scalar_select %p30, %s32, %s23
      %p34 = scmp.ge.s32.totalorder %s33, 4
      %s35 = scalar_select %p34, 0, %s33
      %s36 = ssub.s32 %s23, %s35
      %p37 = scmp.eq.s32.totalorder %s36, 0
      %s39 = sadd.s32 %s38, 1
      %s40 = scalar_select %p37, %s38, %s39
      %p43 = pneg %p37
      %p44 = scmp.eq.s32.totalorder %s16, 3
      %p45 = por %p43, %p44
      %p46 = scmp.ne.s32.totalorder %s38, %s41
      %p47 = scmp.eq.s32.totalorder %s16, 0
      %p48 = por %p46, %p47
      %p49 = scmp.ne.s32.totalorder %s38, %s41
      %p50 = scmp.eq.s32.totalorder %s21, 3
      %p51 = por %p49, %p50
      %p52 = scmp.ne.s32.totalorder %s41, %s42
      %p53 = scmp.eq.s32.totalorder %s21, 0
      %p54 = por %p52, %p53
      %p55 = scmp.ne.s32.totalorder %s41, %s42
      %p56 = scmp.eq.s32.totalorder %s22, 3
      %p57 = por %p55, %p56
      %p59 = scmp.ne.s32.totalorder %s42, %s58
      %p60 = scmp.eq.s32.totalorder %s22, 0
      %p61 = por %p59, %p60
      %s62 = ssub.s32 %s24, %s31
      %p63 = scmp.eq.s32.totalorder %s62, 0
      %s65 = sadd.s32 %s64, 1
      %s66 = scalar_select %p63, %s64, %s65
      %p69 = pneg %p63
      %p70 = scmp.eq.s32.totalorder %s16, 3
      %p71 = por %p69, %p70
      %p72 = scmp.ne.s32.totalorder %s64, %s67
      %p73 = scmp.eq.s32.totalorder %s16, 0
      %p74 = por %p72, %p73
      %p75 = scmp.ne.s32.totalorder %s64, %s67
      %p76 = scmp.eq.s32.totalorder %s21, 3
      %p77 = por %p75, %p76
      %p78 = scmp.ne.s32.totalorder %s67, %s68
      %p79 = scmp.eq.s32.totalorder %s21, 0
      %p80 = por %p78, %p79
      %p81 = scmp.ne.s32.totalorder %s67, %s68
      %p82 = scmp.eq.s32.totalorder %s22, 3
      %p83 = por %p81, %p82
      %p85 = scmp.ne.s32.totalorder %s68, %s84
      %p86 = scmp.eq.s32.totalorder %s22, 0
      %p87 = por %p85, %p86
      %s88 = ssub.s32 %s24, %s31
      %p89 = scmp.eq.s32.totalorder %s88, 0
      %s91 = sadd.s32 %s90, 1
      %s92 = scalar_select %p89, %s90, %s91
      %p95 = pneg %p89
      %p96 = scmp.eq.s32.totalorder %s16, 3
      %p97 = por %p95, %p96
      %p98 = scmp.ne.s32.totalorder %s90, %s93
      %p99 = scmp.eq.s32.totalorder %s16, 0
      %p100 = por %p98, %p99
      %p101 = scmp.ne.s32.totalorder %s90, %s93
      %p102 = scmp.eq.s32.totalorder %s21, 3
      %p103 = por %p101, %p102
      %p104 = scmp.ne.s32.totalorder %s93, %s94
      %p105 = scmp.eq.s32.totalorder %s21, 0
      %p106 = por %p104, %p105
      %p107 = scmp.ne.s32.totalorder %s93, %s94
      %p108 = scmp.eq.s32.totalorder %s22, 3
      %p109 = por %p107, %p108
      %p111 = scmp.ne.s32.totalorder %s94, %s110
      %p112 = scmp.eq.s32.totalorder %s22, 0
      %p113 = por %p111, %p112
      %s114 = ssub.s32 %s23, %s35
      %s115 = ssub.s32 %s24, %s31
      %s116 = sor.u32 %s114, %s115
      %p117 = scmp.eq.s32.totalorder %s116, 0
      %s119 = sadd.s32 %s118, 1
      %s120 = scalar_select %p117, %s118, %s119
      %p123 = pneg %p117
      %p124 = scmp.eq.s32.totalorder %s16, 3
      %p125 = por %p123, %p124
      %p126 = scmp.ne.s32.totalorder %s118, %s121
      %p127 = scmp.eq.s32.totalorder %s16, 0
      %p128 = por %p126, %p127
      %p129 = scmp.ne.s32.totalorder %s118, %s121
      %p130 = scmp.eq.s32.totalorder %s21, 3
      %p131 = por %p129, %p130
      %p132 = scmp.ne.s32.totalorder %s121, %s122
      %p133 = scmp.eq.s32.totalorder %s21, 0
      %p134 = por %p132, %p133
      %p135 = scmp.ne.s32.totalorder %s121, %s122
      %p136 = scmp.eq.s32.totalorder %s22, 3
      %p137 = por %p135, %p136
      %p139 = scmp.ne.s32.totalorder %s122, %s138
      %p140 = scmp.eq.s32.totalorder %s22, 0
      %p141 = por %p139, %p140
      %p142 = scmp.le.s32.totalorder 1, %s16
      %p143 = scmp.lt.s32.totalorder %s16, 5
      %p144 = pnand %p142, %p143
      %p145 = pneg %p144
      // Predicated region
      $region9: #{tpu_custom_call.1} parent=5 // pred_check
        _
      $region10: #{tpu_custom_call.1} parent=5 // pred_check_branch
        %147 = sbr.rel (%p144) target = $region12
      $region11: #{tpu_custom_call.1} parent=5 // pred_region
        %s148 = ssub.s32 %s16, 1
        // Predicated region
        $region13: #{tpu_custom_call.1} parent=11 // pred_check
          %p149 = pneg %p80
        $region14: #{tpu_custom_call.1} parent=11 // pred_check_branch
          %151 = sbr.rel (%p149) target = $region16
        $region15: #{tpu_custom_call.1} parent=11 // pred_region
          %153 = vsyncadd [#allocation6], 0
          %s154 = smul.addr %s26, 4
          %s155 = scalar_lea.hbm %s1, %s154
          %s156 = sshll.u32 %s155, 4
          %s157 = int_to_ptr.hbm [resolvable:$true] %s156
          %s158 = sshll.u32 [#allocation5], 4
          %s159 = int_to_ptr.vmem [resolvable:$true] %s158
          %164 = dma.hbm_to_vmem [thread:$0]  %s157, 1024, %s159, [#allocation6], 64, 64, 4
        $region16: #{tpu_custom_call.1} parent=11 // pred_fallthru
          _
        // Predicated region
        $region17: #{tpu_custom_call.1} parent=11 // pred_check
          %p165 = pneg %p106
        $region18: #{tpu_custom_call.1} parent=11 // pred_check_branch
          %167 = sbr.rel (%p165) target = $region20
        $region19: #{tpu_custom_call.1} parent=11 // pred_region
          %p168 = scmp.lt.s32.totalorder %s26, 0
          %s169 = scalar_select %p168, %s26, 0
          %s170 = scalar_lea.vmem %s2, %s169
        $region20: #{tpu_custom_call.1} parent=11 // pred_fallthru
          _
      $region12: #{tpu_custom_call.1} parent=5 // pred_fallthru
        _
      %p171 = scmp.lt.s32.totalorder %s16, 4
      // Predicated region
      $region21: #{tpu_custom_call.1} parent=5 // pred_check
        %p172 = pneg %p171
      $region22: #{tpu_custom_call.1} parent=5 // pred_check_branch
        %174 = sbr.rel (%p172) target = $region24
      $region23: #{tpu_custom_call.1} parent=5 // pred_region
        // Predicated region
        $region25: #{tpu_custom_call.1} parent=23 // pred_check
          %p175 = pneg %p48
        $region26: #{tpu_custom_call.1} parent=23 // pred_check_branch
          %177 = sbr.rel (%p175) target = $region28
        $region27: #{tpu_custom_call.1} parent=23 // pred_region
          %s178 = sand.u32 %s38, 1
          %s179 = scalar_lea.sflag [#allocation3], %s178
          %s180 = sand.u32 %s38, 1
          %s181 = smul.addr %s180, 128
          %s182 = scalar_lea.vmem [#allocation2], %s181
          %s183 = smul.u32 16, %s23
          %185 = vsyncadd %s179, 0
          %s186 = smul.addr %s183, 8
          %s187 = scalar_lea.hbm %s0, %s186
          %s188 = sshll.u32 %s187, 4
          %s189 = int_to_ptr.hbm [resolvable:$true] %s188
          %s190 = sshll.u32 %s182, 4
          %s191 = int_to_ptr.vmem [resolvable:$true] %s190
          %196 = dma.hbm_to_vmem [thread:$0]  %s189, 2048, %s191, %s179, 128, 128, 8
        $region28: #{tpu_custom_call.1} parent=23 // pred_fallthru
          _
      $region24: #{tpu_custom_call.1} parent=5 // pred_fallthru
        _
      %p197 = scmp.le.s32.totalorder 1, %s16
      %p198 = scmp.lt.s32.totalorder %s16, 5
      %p199 = pnand %p197, %p198
      %p200 = pneg %p199
      // Predicated region
      $region29: #{tpu_custom_call.1} parent=5 // pred_check
        _
      $region30: #{tpu_custom_call.1} parent=5 // pred_check_branch
        %202 = sbr.rel (%p199) target = $region32
      $region31: #{tpu_custom_call.1} parent=5 // pred_region
        %s203 = ssub.s32 %s16, 1
        %s204 = sand.u32 %s41, 1
        %s205 = scalar_lea.sflag [#allocation3], %s204
        %s206 = sand.u32 %s41, 1
        %s207 = smul.addr %s206, 128
        %s208 = scalar_lea.vmem [#allocation2], %s207
        // Predicated region
        $region33: #{tpu_custom_call.1} parent=31 // pred_check
          %p209 = pneg %p54
        $region34: #{tpu_custom_call.1} parent=31 // pred_check_branch
          %211 = sbr.rel (%p209) target = $region36
        $region35: #{tpu_custom_call.1} parent=31 // pred_region
          %213 = dma.done %s205, 2048
        $region36: #{tpu_custom_call.1} parent=31 // pred_fallthru
          _
        // Predicated region
        $region37: #{tpu_custom_call.1} parent=31 // pred_check
          %p214 = pneg %p80
        $region38: #{tpu_custom_call.1} parent=31 // pred_check_branch
          %216 = sbr.rel (%p214) target = $region40
        $region39: #{tpu_custom_call.1} parent=31 // pred_region
          %218 = dma.done [#allocation6], 1024
        $region40: #{tpu_custom_call.1} parent=31 // pred_fallthru
          _
        %s219 = sand.u32 %s41, 1
        %s220 = scalar_lea.sflag [#allocation3], %s219
        %s221 = sand.u32 %s41, 1
        %s222 = smul.addr %s221, 128
        %s223 = scalar_lea.vmem [#allocation2], %s222
        %p224 = pneg %p54
        %p225 = pneg %p51
        %p226 = pneg %p80
        %p227 = pneg %p77
        %p228 = scmp.lt.s32.totalorder %s26, 0
        %s229 = scalar_select %p228, %s26, 0
        %s230 = scalar_lea.vmem %s2, %s229
        %p231 = pneg %p106
        %p232 = pneg %p103
        %p233 = pneg %p134
        %p234 = pneg %p131
        %s235 = sand.u32 %s121, 1
        %s236 = scalar_lea.sflag [#allocation4], %s235
        %s237 = sand.u32 %s121, 1
        %s238 = smul.addr %s237, 128
        %s239 = scalar_lea.vmem [#allocation7], %s238
        %s240 = smul.u32 16, %s25
        %p241 = scmp.lt.s32.totalorder %s26, 0
        %s242 = scalar_select %p241, %s26, 0
        %s243 = scalar_lea.vmem %s2, %s242
        %s244 = smul.u32 16, %s25
        %v245 = vld [vmem:[%s208] sm:$0xff]
        %v246 = vld [vmem:[%s208 + $0x8] sm:$0xff]
        %v247 = vld [vmem:[%s208 + $0x10] sm:$0xff]
        %v248 = vld [vmem:[%s208 + $0x18] sm:$0xff]
        %v249 = vld [vmem:[%s208 + $0x20] sm:$0xff]
        %v250 = vld [vmem:[%s208 + $0x28] sm:$0xff]
        %v251 = vld [vmem:[%s208 + $0x30] sm:$0xff]
        %v252 = vld [vmem:[%s208 + $0x38] sm:$0xff]
        %v253 = vld [vmem:[%s208 + $0x40] sm:$0xff]
        %v254 = vld [vmem:[%s208 + $0x48] sm:$0xff]
        %v255 = vld [vmem:[%s208 + $0x50] sm:$0xff]
        %v256 = vld [vmem:[%s208 + $0x58] sm:$0xff]
        %v257 = vld [vmem:[%s208 + $0x60] sm:$0xff]
        %v258 = vld [vmem:[%s208 + $0x68] sm:$0xff]
        %v259 = vld [vmem:[%s208 + $0x70] sm:$0xff]
        %v260 = vld [vmem:[%s208 + $0x78] sm:$0xff]
        %261 = vadd.xlane.f32.xlu0 %v245
        %v262 = vpop.xlane.xlu0 %261
        %263 = vadd.xlane.f32.xlu0 %v246
        %v264 = vpop.xlane.xlu0 %263
        %265 = vadd.xlane.f32.xlu0 %v247
        %v266 = vpop.xlane.xlu0 %265
        %267 = vadd.xlane.f32.xlu0 %v248
        %v268 = vpop.xlane.xlu0 %267
        %269 = vadd.xlane.f32.xlu0 %v249
        %v270 = vpop.xlane.xlu0 %269
        %271 = vadd.xlane.f32.xlu0 %v250
        %v272 = vpop.xlane.xlu0 %271
        %273 = vadd.xlane.f32.xlu0 %v251
        %v274 = vpop.xlane.xlu0 %273
        %275 = vadd.xlane.f32.xlu0 %v252
        %v276 = vpop.xlane.xlu0 %275
        %277 = vadd.xlane.f32.xlu0 %v253
        %v278 = vpop.xlane.xlu0 %277
        %279 = vadd.xlane.f32.xlu0 %v254
        %v280 = vpop.xlane.xlu0 %279
        %281 = vadd.xlane.f32.xlu0 %v255
        %v282 = vpop.xlane.xlu0 %281
        %283 = vadd.xlane.f32.xlu0 %v256
        %v284 = vpop.xlane.xlu0 %283
        %285 = vadd.xlane.f32.xlu0 %v257
        %v286 = vpop.xlane.xlu0 %285
        %287 = vadd.xlane.f32.xlu0 %v258
        %v288 = vpop.xlane.xlu0 %287
        %289 = vadd.xlane.f32.xlu0 %v259
        %v290 = vpop.xlane.xlu0 %289
        %291 = vadd.xlane.f32.xlu0 %v260
        %v292 = vpop.xlane.xlu0 %291
        %v293 = vrcp.pop 128.0
        %v294 = vmul.f32 128.0, %v293
        %v295 = vsub.f32 1.0, %v294
        %v296 = vmul.f32 %v293, %v295
        %v297 = vadd.f32 %v293, %v296
        %vm298 = vweird.f32 %v293
        %v299 = vsel %vm298, %v293, %v297
        %v300 = vmul.f32 %v262, %v299
        %v301 = vmul.f32 %v264, %v299
        %v302 = vmul.f32 %v266, %v299
        %v303 = vmul.f32 %v268, %v299
        %v304 = vmul.f32 %v270, %v299
        %v305 = vmul.f32 %v272, %v299
        %v306 = vmul.f32 %v274, %v299
        %v307 = vmul.f32 %v276, %v299
        %v308 = vmul.f32 %v278, %v299
        %v309 = vmul.f32 %v280, %v299
        %v310 = vmul.f32 %v282, %v299
        %v311 = vmul.f32 %v284, %v299
        %v312 = vmul.f32 %v286, %v299
        %v313 = vmul.f32 %v288, %v299
        %v314 = vmul.f32 %v290, %v299
        %v315 = vmul.f32 %v292, %v299
        %v316 = vsub.f32 %v245, %v300
        %v317 = vsub.f32 %v246, %v301
        %v318 = vsub.f32 %v247, %v302
        %v319 = vsub.f32 %v248, %v303
        %v320 = vsub.f32 %v249, %v304
        %v321 = vsub.f32 %v250, %v305
        %v322 = vsub.f32 %v251, %v306
        %v323 = vsub.f32 %v252, %v307
        %v324 = vsub.f32 %v253, %v308
        %v325 = vsub.f32 %v254, %v309
        %v326 = vsub.f32 %v255, %v310
        %v327 = vsub.f32 %v256, %v311
        %v328 = vsub.f32 %v257, %v312
        %v329 = vsub.f32 %v258, %v313
        %v330 = vsub.f32 %v259, %v314
        %v331 = vsub.f32 %v260, %v315
        %v332 = vmul.f32 %v316, %v316
        %v333 = vmul.f32 %v317, %v317
        %v334 = vmul.f32 %v318, %v318
        %v335 = vmul.f32 %v319, %v319
        %v336 = vmul.f32 %v320, %v320
        %v337 = vmul.f32 %v321, %v321
        %v338 = vmul.f32 %v322, %v322
        %v339 = vmul.f32 %v323, %v323
        %v340 = vmul.f32 %v324, %v324
        %v341 = vmul.f32 %v325, %v325
        %v342 = vmul.f32 %v326, %v326
        %v343 = vmul.f32 %v327, %v327
        %v344 = vmul.f32 %v328, %v328
        %v345 = vmul.f32 %v329, %v329
        %v346 = vmul.f32 %v330, %v330
        %v347 = vmul.f32 %v331, %v331
        %348 = vadd.xlane.f32.xlu0 %v332
        %v349 = vpop.xlane.xlu0 %348
        %350 = vadd.xlane.f32.xlu0 %v333
        %v351 = vpop.xlane.xlu0 %350
        %352 = vadd.xlane.f32.xlu0 %v334
        %v353 = vpop.xlane.xlu0 %352
        %354 = vadd.xlane.f32.xlu0 %v335
        %v355 = vpop.xlane.xlu0 %354
        %356 = vadd.xlane.f32.xlu0 %v336
        %v357 = vpop.xlane.xlu0 %356
        %358 = vadd.xlane.f32.xlu0 %v337
        %v359 = vpop.xlane.xlu0 %358
        %360 = vadd.xlane.f32.xlu0 %v338
        %v361 = vpop.xlane.xlu0 %360
        %362 = vadd.xlane.f32.xlu0 %v339
        %v363 = vpop.xlane.xlu0 %362
        %364 = vadd.xlane.f32.xlu0 %v340
        %v365 = vpop.xlane.xlu0 %364
        %366 = vadd.xlane.f32.xlu0 %v341
        %v367 = vpop.xlane.xlu0 %366
        %368 = vadd.xlane.f32.xlu0 %v342
        %v369 = vpop.xlane.xlu0 %368
        %370 = vadd.xlane.f32.xlu0 %v343
        %v371 = vpop.xlane.xlu0 %370
        %372 = vadd.xlane.f32.xlu0 %v344
        %v373 = vpop.xlane.xlu0 %372
        %374 = vadd.xlane.f32.xlu0 %v345
        %v375 = vpop.xlane.xlu0 %374
        %376 = vadd.xlane.f32.xlu0 %v346
        %v377 = vpop.xlane.xlu0 %376
        %378 = vadd.xlane.f32.xlu0 %v347
        %v379 = vpop.xlane.xlu0 %378
        %v380 = vmul.f32 %v349, 0.007874016
        %v381 = vmul.f32 %v351, 0.007874016
        %v382 = vmul.f32 %v353, 0.007874016
        %v383 = vmul.f32 %v355, 0.007874016
        %v384 = vmul.f32 %v357, 0.007874016
        %v385 = vmul.f32 %v359, 0.007874016
        %v386 = vmul.f32 %v361, 0.007874016
        %v387 = vmul.f32 %v363, 0.007874016
        %v388 = vmul.f32 %v365, 0.007874016
        %v389 = vmul.f32 %v367, 0.007874016
        %v390 = vmul.f32 %v369, 0.007874016
        %v391 = vmul.f32 %v371, 0.007874016
        %v392 = vmul.f32 %v373, 0.007874016
        %v393 = vmul.f32 %v375, 0.007874016
        %v394 = vmul.f32 %v377, 0.007874016
        %v395 = vmul.f32 %v379, 0.007874016
        %v396 = vrsqrt.pop %v380
        %v397 = vmul.f32 %v396, %v380
        %v398 = vmul.f32 %v397, %v396
        %v399 = vmul.f32 0.5, %v398
        %v400 = vsub.f32 1.5, %v399
        %v401 = vmul.f32 %v396, %v400
        %v402 = vmul.f32 %v380, %v401
        %vm403 = vcmp.eq.f32.partialorder %v380, inf
        %v404 = vsel %vm403, %v380, %v402
        %vm405 = vcmp.eq.f32.partialorder %v380, 0.0
        %v406 = vand.u32 %v380, 2147483648
        %v407 = vsel %vm405, %v406, %v404
        %v408 = vrsqrt.pop %v381
        %v409 = vmul.f32 %v408, %v381
        %v410 = vmul.f32 %v409, %v408
        %v411 = vmul.f32 0.5, %v410
        %v412 = vsub.f32 1.5, %v411
        %v413 = vmul.f32 %v408, %v412
        %v414 = vmul.f32 %v381, %v413
        %vm415 = vcmp.eq.f32.partialorder %v381, inf
        %v416 = vsel %vm415, %v381, %v414
        %vm417 = vcmp.eq.f32.partialorder %v381, 0.0
        %v418 = vand.u32 %v381, 2147483648
        %v419 = vsel %vm417, %v418, %v416
        %v420 = vrsqrt.pop %v382
        %v421 = vmul.f32 %v420, %v382
        %v422 = vmul.f32 %v421, %v420
        %v423 = vmul.f32 0.5, %v422
        %v424 = vsub.f32 1.5, %v423
        %v425 = vmul.f32 %v420, %v424
        %v426 = vmul.f32 %v382, %v425
        %vm427 = vcmp.eq.f32.partialorder %v382, inf
        %v428 = vsel %vm427, %v382, %v426
        %vm429 = vcmp.eq.f32.partialorder %v382, 0.0
        %v430 = vand.u32 %v382, 2147483648
        %v431 = vsel %vm429, %v430, %v428
        %v432 = vrsqrt.pop %v383
        %v433 = vmul.f32 %v432, %v383
        %v434 = vmul.f32 %v433, %v432
        %v435 = vmul.f32 0.5, %v434
        %v436 = vsub.f32 1.5, %v435
        %v437 = vmul.f32 %v432, %v436
        %v438 = vmul.f32 %v383, %v437
        %vm439 = vcmp.eq.f32.partialorder %v383, inf
        %v440 = vsel %vm439, %v383, %v438
        %vm441 = vcmp.eq.f32.partialorder %v383, 0.0
        %v442 = vand.u32 %v383, 2147483648
        %v443 = vsel %vm441, %v442, %v440
        %v444 = vrsqrt.pop %v384
        %v445 = vmul.f32 %v444, %v384
        %v446 = vmul.f32 %v445, %v444
        %v447 = vmul.f32 0.5, %v446
        %v448 = vsub.f32 1.5, %v447
        %v449 = vmul.f32 %v444, %v448
        %v450 = vmul.f32 %v384, %v449
        %vm451 = vcmp.eq.f32.partialorder %v384, inf
        %v452 = vsel %vm451, %v384, %v450
        %vm453 = vcmp.eq.f32.partialorder %v384, 0.0
        %v454 = vand.u32 %v384, 2147483648
        %v455 = vsel %vm453, %v454, %v452
        %v456 = vrsqrt.pop %v385
        %v457 = vmul.f32 %v456, %v385
        %v458 = vmul.f32 %v457, %v456
        %v459 = vmul.f32 0.5, %v458
        %v460 = vsub.f32 1.5, %v459
        %v461 = vmul.f32 %v456, %v460
        %v462 = vmul.f32 %v385, %v461
        %vm463 = vcmp.eq.f32.partialorder %v385, inf
        %v464 = vsel %vm463, %v385, %v462
        %vm465 = vcmp.eq.f32.partialorder %v385, 0.0
        %v466 = vand.u32 %v385, 2147483648
        %v467 = vsel %vm465, %v466, %v464
        %v468 = vrsqrt.pop %v386
        %v469 = vmul.f32 %v468, %v386
        %v470 = vmul.f32 %v469, %v468
        %v471 = vmul.f32 0.5, %v470
        %v472 = vsub.f32 1.5, %v471
        %v473 = vmul.f32 %v468, %v472
        %v474 = vmul.f32 %v386, %v473
        %vm475 = vcmp.eq.f32.partialorder %v386, inf
        %v476 = vsel %vm475, %v386, %v474
        %vm477 = vcmp.eq.f32.partialorder %v386, 0.0
        %v478 = vand.u32 %v386, 2147483648
        %v479 = vsel %vm477, %v478, %v476
        %v480 = vrsqrt.pop %v387
        %v481 = vmul.f32 %v480, %v387
        %v482 = vmul.f32 %v481, %v480
        %v483 = vmul.f32 0.5, %v482
        %v484 = vsub.f32 1.5, %v483
        %v485 = vmul.f32 %v480, %v484
        %v486 = vmul.f32 %v387, %v485
        %vm487 = vcmp.eq.f32.partialorder %v387, inf
        %v488 = vsel %vm487, %v387, %v486
        %vm489 = vcmp.eq.f32.partialorder %v387, 0.0
        %v490 = vand.u32 %v387, 2147483648
        %v491 = vsel %vm489, %v490, %v488
        %v492 = vrsqrt.pop %v388
        %v493 = vmul.f32 %v492, %v388
        %v494 = vmul.f32 %v493, %v492
        %v495 = vmul.f32 0.5, %v494
        %v496 = vsub.f32 1.5, %v495
        %v497 = vmul.f32 %v492, %v496
        %v498 = vmul.f32 %v388, %v497
        %vm499 = vcmp.eq.f32.partialorder %v388, inf
        %v500 = vsel %vm499, %v388, %v498
        %vm501 = vcmp.eq.f32.partialorder %v388, 0.0
        %v502 = vand.u32 %v388, 2147483648
        %v503 = vsel %vm501, %v502, %v500
        %v504 = vrsqrt.pop %v389
        %v505 = vmul.f32 %v504, %v389
        %v506 = vmul.f32 %v505, %v504
        %v507 = vmul.f32 0.5, %v506
        %v508 = vsub.f32 1.5, %v507
        %v509 = vmul.f32 %v504, %v508
        %v510 = vmul.f32 %v389, %v509
        %vm511 = vcmp.eq.f32.partialorder %v389, inf
        %v512 = vsel %vm511, %v389, %v510
        %vm513 = vcmp.eq.f32.partialorder %v389, 0.0
        %v514 = vand.u32 %v389, 2147483648
        %v515 = vsel %vm513, %v514, %v512
        %v516 = vrsqrt.pop %v390
        %v517 = vmul.f32 %v516, %v390
        %v518 = vmul.f32 %v517, %v516
        %v519 = vmul.f32 0.5, %v518
        %v520 = vsub.f32 1.5, %v519
        %v521 = vmul.f32 %v516, %v520
        %v522 = vmul.f32 %v390, %v521
        %vm523 = vcmp.eq.f32.partialorder %v390, inf
        %v524 = vsel %vm523, %v390, %v522
        %vm525 = vcmp.eq.f32.partialorder %v390, 0.0
        %v526 = vand.u32 %v390, 2147483648
        %v527 = vsel %vm525, %v526, %v524
        %v528 = vrsqrt.pop %v391
        %v529 = vmul.f32 %v528, %v391
        %v530 = vmul.f32 %v529, %v528
        %v531 = vmul.f32 0.5, %v530
        %v532 = vsub.f32 1.5, %v531
        %v533 = vmul.f32 %v528, %v532
        %v534 = vmul.f32 %v391, %v533
        %vm535 = vcmp.eq.f32.partialorder %v391, inf
        %v536 = vsel %vm535, %v391, %v534
        %vm537 = vcmp.eq.f32.partialorder %v391, 0.0
        %v538 = vand.u32 %v391, 2147483648
        %v539 = vsel %vm537, %v538, %v536
        %v540 = vrsqrt.pop %v392
        %v541 = vmul.f32 %v540, %v392
        %v542 = vmul.f32 %v541, %v540
        %v543 = vmul.f32 0.5, %v542
        %v544 = vsub.f32 1.5, %v543
        %v545 = vmul.f32 %v540, %v544
        %v546 = vmul.f32 %v392, %v545
        %vm547 = vcmp.eq.f32.partialorder %v392, inf
        %v548 = vsel %vm547, %v392, %v546
        %vm549 = vcmp.eq.f32.partialorder %v392, 0.0
        %v550 = vand.u32 %v392, 2147483648
        %v551 = vsel %vm549, %v550, %v548
        %v552 = vrsqrt.pop %v393
        %v553 = vmul.f32 %v552, %v393
        %v554 = vmul.f32 %v553, %v552
        %v555 = vmul.f32 0.5, %v554
        %v556 = vsub.f32 1.5, %v555
        %v557 = vmul.f32 %v552, %v556
        %v558 = vmul.f32 %v393, %v557
        %vm559 = vcmp.eq.f32.partialorder %v393, inf
        %v560 = vsel %vm559, %v393, %v558
        %vm561 = vcmp.eq.f32.partialorder %v393, 0.0
        %v562 = vand.u32 %v393, 2147483648
        %v563 = vsel %vm561, %v562, %v560
        %v564 = vrsqrt.pop %v394
        %v565 = vmul.f32 %v564, %v394
        %v566 = vmul.f32 %v565, %v564
        %v567 = vmul.f32 0.5, %v566
        %v568 = vsub.f32 1.5, %v567
        %v569 = vmul.f32 %v564, %v568
        %v570 = vmul.f32 %v394, %v569
        %vm571 = vcmp.eq.f32.partialorder %v394, inf
        %v572 = vsel %vm571, %v394, %v570
        %vm573 = vcmp.eq.f32.partialorder %v394, 0.0
        %v574 = vand.u32 %v394, 2147483648
        %v575 = vsel %vm573, %v574, %v572
        %v576 = vrsqrt.pop %v395
        %v577 = vmul.f32 %v576, %v395
        %v578 = vmul.f32 %v577, %v576
        %v579 = vmul.f32 0.5, %v578
        %v580 = vsub.f32 1.5, %v579
        %v581 = vmul.f32 %v576, %v580
        %v582 = vmul.f32 %v395, %v581
        %vm583 = vcmp.eq.f32.partialorder %v395, inf
        %v584 = vsel %vm583, %v395, %v582
        %vm585 = vcmp.eq.f32.partialorder %v395, 0.0
        %v586 = vand.u32 %v395, 2147483648
        %v587 = vsel %vm585, %v586, %v584
        %v588 = vadd.f32 %v407, 1e-06
        %v589 = vadd.f32 %v419, 1e-06
        %v590 = vadd.f32 %v431, 1e-06
        %v591 = vadd.f32 %v443, 1e-06
        %v592 = vadd.f32 %v455, 1e-06
        %v593 = vadd.f32 %v467, 1e-06
        %v594 = vadd.f32 %v479, 1e-06
        %v595 = vadd.f32 %v491, 1e-06
        %v596 = vadd.f32 %v503, 1e-06
        %v597 = vadd.f32 %v515, 1e-06
        %v598 = vadd.f32 %v527, 1e-06
        %v599 = vadd.f32 %v539, 1e-06
        %v600 = vadd.f32 %v551, 1e-06
        %v601 = vadd.f32 %v563, 1e-06
        %v602 = vadd.f32 %v575, 1e-06
        %v603 = vadd.f32 %v587, 1e-06
        %v604 = vrcp.pop %v588
        %v605 = vrcp.pop %v589
        %v606 = vrcp.pop %v590
        %v607 = vrcp.pop %v591
        %v608 = vrcp.pop %v592
        %v609 = vrcp.pop %v593
        %v610 = vrcp.pop %v594
        %v611 = vrcp.pop %v595
        %v612 = vrcp.pop %v596
        %v613 = vrcp.pop %v597
        %v614 = vrcp.pop %v598
        %v615 = vrcp.pop %v599
        %v616 = vrcp.pop %v600
        %v617 = vrcp.pop %v601
        %v618 = vrcp.pop %v602
        %v619 = vrcp.pop %v603
        %v620 = vmul.f32 %v316, %v604
        %v621 = vmul.f32 %v317, %v605
        %v622 = vmul.f32 %v318, %v606
        %v623 = vmul.f32 %v319, %v607
        %v624 = vmul.f32 %v320, %v608
        %v625 = vmul.f32 %v321, %v609
        %v626 = vmul.f32 %v322, %v610
        %v627 = vmul.f32 %v323, %v611
        %v628 = vmul.f32 %v324, %v612
        %v629 = vmul.f32 %v325, %v613
        %v630 = vmul.f32 %v326, %v614
        %v631 = vmul.f32 %v327, %v615
        %v632 = vmul.f32 %v328, %v616
        %v633 = vmul.f32 %v329, %v617
        %v634 = vmul.f32 %v330, %v618
        %v635 = vmul.f32 %v331, %v619
        %v636 = vpack.c.bf16 %v621, %v620
        %v637 = vpack.c.bf16 %v623, %v622
        %v638 = vpack.c.bf16 %v625, %v624
        %v639 = vpack.c.bf16 %v627, %v626
        %v640 = vpack.c.bf16 %v629, %v628
        %v641 = vpack.c.bf16 %v631, %v630
        %v642 = vpack.c.bf16 %v633, %v632
        %v643 = vpack.c.bf16 %v635, %v634
        %v644 = vld [vmem:[#allocation5] sm:$0xf]
        %v645 = vld [vmem:[#allocation5 + $0x4] sm:$0xf]
        %v646 = vld [vmem:[#allocation5 + $0x8] sm:$0xf]
        %v647 = vld [vmem:[#allocation5 + $0xc] sm:$0xf]
        %v648 = vld [vmem:[#allocation5 + $0x10] sm:$0xf]
        %v649 = vld [vmem:[#allocation5 + $0x14] sm:$0xf]
        %v650 = vld [vmem:[#allocation5 + $0x18] sm:$0xf]
        %v651 = vld [vmem:[#allocation5 + $0x1c] sm:$0xf]
        %v652 = vld [vmem:[#allocation5 + $0x20] sm:$0xf]
        %v653 = vld [vmem:[#allocation5 + $0x24] sm:$0xf]
        %v654 = vld [vmem:[#allocation5 + $0x28] sm:$0xf]
        %v655 = vld [vmem:[#allocation5 + $0x2c] sm:$0xf]
        %v656 = vld [vmem:[#allocation5 + $0x30] sm:$0xf]
        %v657 = vld [vmem:[#allocation5 + $0x34] sm:$0xf]
        %v658 = vld [vmem:[#allocation5 + $0x38] sm:$0xf]
        %v659 = vld [vmem:[#allocation5 + $0x3c] sm:$0xf]
        %v660 = vld [vmem:[%s243] sm:$0x1]
        %v662 = vperm.slane %v660, 0
        %v680 = vunpack.c.l.b16 %v644
        %v681 = vunpack.c.l.b16 %v645
        %v682 = vunpack.c.l.b16 %v646
        %v683 = vunpack.c.l.b16 %v647
        %v684 = vunpack.c.l.b16 %v648
        %v685 = vunpack.c.l.b16 %v649
        %v686 = vunpack.c.l.b16 %v650
        %v687 = vunpack.c.l.b16 %v651
        %v688 = vunpack.c.l.b16 %v652
        %v689 = vunpack.c.l.b16 %v653
        %v690 = vunpack.c.l.b16 %v654
        %v691 = vunpack.c.l.b16 %v655
        %v692 = vunpack.c.l.b16 %v656
        %v693 = vunpack.c.l.b16 %v657
        %v694 = vunpack.c.l.b16 %v658
        %v695 = vunpack.c.l.b16 %v659
        %v696 = vpack.c.b16 %v681, %v680
        %v697 = vpack.c.b16 %v683, %v682
        %v698 = vpack.c.b16 %v685, %v684
        %v699 = vpack.c.b16 %v687, %v686
        %v700 = vpack.c.b16 %v689, %v688
        %v701 = vpack.c.b16 %v691, %v690
        %v702 = vpack.c.b16 %v693, %v692
        %v703 = vpack.c.b16 %v695, %v694
        %712 = vmatpush.bf16.msra.mxu0 %v703
        %713 = vmatpush.bf16.msra.mxu0 %v702
        %714 = vmatpush.bf16.msra.mxu0 %v701
        %715 = vmatpush.bf16.msra.mxu0 %v700
        %716 = vmatpush.bf16.msra.mxu0 %v699
        %717 = vmatpush.bf16.msra.mxu0 %v698
        %718 = vmatpush.bf16.msra.mxu0 %v697
        %719 = vmatpush.bf16.msra.mxu0 %v696
        %720 = vmatmul.bf16.gmra.mxu0 %v636
        %v721 = vpop.f32.mrf.mxu0
        %v722 = vadd.f32 %v662, %v721
        %v723 = vpop.f32.mrf.mxu0
        %v724 = vadd.f32 %v662, %v723
        %725 = vmatmul.bf16.gmra.mxu0 %v637
        %v726 = vpop.f32.mrf.mxu0
        %v727 = vadd.f32 %v662, %v726
        %v728 = vpop.f32.mrf.mxu0
        %v729 = vadd.f32 %v662, %v728
        %730 = vmatmul.bf16.gmra.mxu0 %v638
        %v731 = vpop.f32.mrf.mxu0
        %v732 = vadd.f32 %v662, %v731
        %v733 = vpop.f32.mrf.mxu0
        %v734 = vadd.f32 %v662, %v733
        %735 = vmatmul.bf16.gmra.mxu0 %v639
        %v736 = vpop.f32.mrf.mxu0
        %v737 = vadd.f32 %v662, %v736
        %v738 = vpop.f32.mrf.mxu0
        %v739 = vadd.f32 %v662, %v738
        %740 = vmatmul.bf16.gmra.mxu0 %v640
        %v741 = vpop.f32.mrf.mxu0
        %v742 = vadd.f32 %v662, %v741
        %v743 = vpop.f32.mrf.mxu0
        %v744 = vadd.f32 %v662, %v743
        %745 = vmatmul.bf16.gmra.mxu0 %v641
        %v746 = vpop.f32.mrf.mxu0
        %v747 = vadd.f32 %v662, %v746
        %v748 = vpop.f32.mrf.mxu0
        %v749 = vadd.f32 %v662, %v748
        %750 = vmatmul.bf16.gmra.mxu0 %v642
        %v751 = vpop.f32.mrf.mxu0
        %v752 = vadd.f32 %v662, %v751
        %v753 = vpop.f32.mrf.mxu0
        %v754 = vadd.f32 %v662, %v753
        %755 = vmatmul.bf16.gmra.mxu0 %v643
        %v756 = vpop.f32.mrf.mxu0
        %v757 = vadd.f32 %v662, %v756
        %v758 = vpop.f32.mrf.mxu0
        %v759 = vadd.f32 %v662, %v758
        %760 = vdwg.mxu0
        %v761 = vadd.f32 %v245, %v722
        %v762 = vadd.f32 %v246, %v724
        %v763 = vadd.f32 %v247, %v727
        %v764 = vadd.f32 %v248, %v729
        %v765 = vadd.f32 %v249, %v732
        %v766 = vadd.f32 %v250, %v734
        %v767 = vadd.f32 %v251, %v737
        %v768 = vadd.f32 %v252, %v739
        %v769 = vadd.f32 %v253, %v742
        %v770 = vadd.f32 %v254, %v744
        %v771 = vadd.f32 %v255, %v747
        %v772 = vadd.f32 %v256, %v749
        %v773 = vadd.f32 %v257, %v752
        %v774 = vadd.f32 %v258, %v754
        %v775 = vadd.f32 %v259, %v757
        %v776 = vadd.f32 %v260, %v759
        %777 = vst [vmem:[%s239] sm:$0xff] %v761
        %778 = vst [vmem:[%s239 + $0x8] sm:$0xff] %v762
        %779 = vst [vmem:[%s239 + $0x10] sm:$0xff] %v763
        %780 = vst [vmem:[%s239 + $0x18] sm:$0xff] %v764
        %781 = vst [vmem:[%s239 + $0x20] sm:$0xff] %v765
        %782 = vst [vmem:[%s239 + $0x28] sm:$0xff] %v766
        %783 = vst [vmem:[%s239 + $0x30] sm:$0xff] %v767
        %784 = vst [vmem:[%s239 + $0x38] sm:$0xff] %v768
        %785 = vst [vmem:[%s239 + $0x40] sm:$0xff] %v769
        %786 = vst [vmem:[%s239 + $0x48] sm:$0xff] %v770
        %787 = vst [vmem:[%s239 + $0x50] sm:$0xff] %v771
        %788 = vst [vmem:[%s239 + $0x58] sm:$0xff] %v772
        %789 = vst [vmem:[%s239 + $0x60] sm:$0xff] %v773
        %790 = vst [vmem:[%s239 + $0x68] sm:$0xff] %v774
        %791 = vst [vmem:[%s239 + $0x70] sm:$0xff] %v775
        %792 = vst [vmem:[%s239 + $0x78] sm:$0xff] %v776
        %s793 = sand.u32 %s121, 1
        %s794 = scalar_lea.sflag [#allocation4], %s793
        %s795 = sand.u32 %s121, 1
        %s796 = smul.addr %s795, 128
        %s797 = scalar_lea.vmem [#allocation7], %s796
        // Predicated region
        $region41: #{tpu_custom_call.1} parent=31 // pred_check
          %p798 = pneg %p131
        $region42: #{tpu_custom_call.1} parent=31 // pred_check_branch
          %800 = sbr.rel (%p798) target = $region44
        $region43: #{tpu_custom_call.1} parent=31 // pred_region
          %s801 = smul.u32 16, %s25
          %803 = vsyncadd %s794, 0
          %s804 = sadd.s32 %s26, %s801
          %s805 = smul.addr %s804, 8
          %s806 = scalar_lea.hbm %s3, %s805
          %s807 = sshll.u32 %s797, 4
          %s808 = int_to_ptr.vmem [resolvable:$true] %s807
          %s809 = sshll.u32 %s806, 4
          %s810 = int_to_ptr.hbm [resolvable:$true] %s809
          %815 = dma.vmem_to_hbm [thread:$0]  %s808, 2048, %s810, %s794, 128, 128, 8
        $region44: #{tpu_custom_call.1} parent=31 // pred_fallthru
          _
      $region32: #{tpu_custom_call.1} parent=5 // pred_fallthru
        _
      %p816 = scmp.le.s32.totalorder 2, %s16
      // Predicated region
      $region45: #{tpu_custom_call.1} parent=5 // pred_check
        %p817 = pneg %p816
      $region46: #{tpu_custom_call.1} parent=5 // pred_check_branch
        %819 = sbr.rel (%p817) target = $region48
      $region47: #{tpu_custom_call.1} parent=5 // pred_region
        %s820 = ssub.s32 %s16, 2
        // Predicated region
        $region49: #{tpu_custom_call.1} parent=47 // pred_check
          %p821 = pneg %p137
        $region50: #{tpu_custom_call.1} parent=47 // pred_check_branch
          %823 = sbr.rel (%p821) target = $region52
        $region51: #{tpu_custom_call.1} parent=47 // pred_region
          %s824 = sand.u32 %s122, 1
          %s825 = scalar_lea.sflag [#allocation4], %s824
          %s826 = sand.u32 %s122, 1
          %s827 = smul.addr %s826, 128
          %s828 = scalar_lea.vmem [#allocation7], %s827
          %830 = dma.done %s825, 2048
        $region52: #{tpu_custom_call.1} parent=47 // pred_fallthru
          _
      $region48: #{tpu_custom_call.1} parent=5 // pred_fallthru
        _
    $region6: #{tpu_custom_call.1} parent=1 // loop_footer
      %s20 = sadd.s32 1, %s16
    $region7: #{tpu_custom_call.1} parent=1 // loop_footer_branch
      %15 = sbr.rel target = $region3
    $region8: #{tpu_custom_call.1} parent=1 // loop_exit
      _
    %831 = vsyncpa [#allocation3], 1
    %s832 = scalar_lea.sflag [#allocation3], 1
    %833 = vsyncpa %s832, 1
    %834 = vsyncpa [#allocation6], 1
    %835 = vsyncpa [#allocation4], 1
    %s836 = scalar_lea.sflag [#allocation4], 1
    %837 = vsyncpa %s836, 1

</llo_original>
